<compile_context>
chip_gen: v7x
topology: tpu7x:2x2x1
jax: 0.10.0
libtpu: 0.0.40
codegen_flags: <defaults>
</compile_context>

<pallas_src>
import functools
import random

import jax
import jax.numpy as jnp
from jax.experimental import pallas as pl
from jax.experimental.pallas import tpu as pltpu

LANE = 128      # lane width: feature dims padded to a multiple of this
SUBLANE = 8     # sublane width: batch padded to a multiple of this


def _round_up(x, m):
    return ((x + m - 1) // m) * m


# ----------------------------------------------------------------------------
# Shared in-kernel LSTM cell math (single fused gate matmul, lane-aligned gates)
# ----------------------------------------------------------------------------
def _lstm_cell_math(xh, w_ref, b_ref, c_prev, h_pad):
    gates = jnp.dot(xh, w_ref[...], preferred_element_type=jnp.float32) + b_ref[...]
    i_g = jax.nn.sigmoid(gates[:, 0 * h_pad:1 * h_pad])   # PyTorch gate order i,f,g,o
    f_g = jax.nn.sigmoid(gates[:, 1 * h_pad:2 * h_pad])
    g_g = jnp.tanh(gates[:, 2 * h_pad:3 * h_pad])
    o_g = jax.nn.sigmoid(gates[:, 3 * h_pad:4 * h_pad])
    c_new = f_g * c_prev + i_g * g_g
    h_new = o_g * jnp.tanh(c_new)
    return h_new, c_new


# ----------------------------------------------------------------------------
# Encoder kernel: grid over source timesteps, h/c carried in VMEM scratch
# ----------------------------------------------------------------------------
def _encoder_kernel(x_ref, w_ref, b_ref, h_out_ref, c_out_ref,
                    xh_ref, h_ref, c_ref, *, e_pad, h_pad):
    t = pl.program_id(0)

    @pl.when(t == 0)
    def _():
        h_ref[...] = jnp.zeros_like(h_ref)
        c_ref[...] = jnp.zeros_like(c_ref)

    # stage [x | h] into a single lane-aligned buffer -> one gate matmul
    xh_ref[:, :e_pad] = x_ref[0]
    xh_ref[:, e_pad:] = h_ref[...]
    h_new, c_new = _lstm_cell_math(xh_ref[...], w_ref, b_ref, c_ref[...], h_pad)
    h_ref[...] = h_new
    c_ref[...] = c_new

    @pl.when(t == pl.num_programs(0) - 1)
    def _():
        h_out_ref[...] = h_new
        c_out_ref[...] = c_new


def _run_encoder(x_emb_all, w, b, h_pad):
    src_len, b_pad, e_pad = x_emb_all.shape
    kern = functools.partial(_encoder_kernel, e_pad=e_pad, h_pad=h_pad)
    return pl.pallas_call(
        kern,
        out_shape=(jax.ShapeDtypeStruct((b_pad, h_pad), jnp.float32),
                   jax.ShapeDtypeStruct((b_pad, h_pad), jnp.float32)),
        grid_spec=pltpu.PrefetchScalarGridSpec(
            num_scalar_prefetch=0,
            grid=(src_len,),
            in_specs=[
                pl.BlockSpec((1, b_pad, e_pad), lambda t: (t, 0, 0)),
                pl.BlockSpec(w.shape, lambda t: (0, 0)),
                pl.BlockSpec(b.shape, lambda t: (0, 0)),
            ],
            out_specs=(
                pl.BlockSpec((b_pad, h_pad), lambda t: (0, 0)),
                pl.BlockSpec((b_pad, h_pad), lambda t: (0, 0)),
            ),
            scratch_shapes=[
                pltpu.VMEM((b_pad, e_pad + h_pad), jnp.float32),  # [x | h]
                pltpu.VMEM((b_pad, h_pad), jnp.float32),          # h state
                pltpu.VMEM((b_pad, h_pad), jnp.float32),          # c state
            ],
        ),
        compiler_params=pltpu.CompilerParams(
            dimension_semantics=("arbitrary",)),
    )(x_emb_all, w, b)


# ----------------------------------------------------------------------------
# Decoder kernel: grid over target timesteps; embedding (one-hot @ table),
# LSTM cell, vocab FC, greedy argmax and teacher-force select all in-kernel.
# ----------------------------------------------------------------------------
def _decoder_kernel(tf_ref,                                    # scalar prefetch (SMEM)
                    tgt_oh_ref, h0_ref, c0_ref, emb_ref,
                    w_ref, b_ref, wfc_ref, bfc_ref,            # inputs
                    pred_ref,                                  # output
                    xh_ref, h_ref, c_ref, x_ref,               # scratch
                    *, e_pad, h_pad, v_pad, v_real):
    s = pl.program_id(0)          # s computes prediction for output row s+1

    @pl.when(s == 0)
    def _():
        h_ref[...] = h0_ref[...]
        c_ref[...] = c0_ref[...]
        x_ref[...] = tgt_oh_ref[0]            # one-hot of target[0]

    # Embedding lookup as one-hot @ table (MXU), then fused gate matmul.
    x_emb = jnp.dot(x_ref[...], emb_ref[...], preferred_element_type=jnp.float32)
    xh_ref[:, :e_pad] = x_emb
    xh_ref[:, e_pad:] = h_ref[...]
    h_new, c_new = _lstm_cell_math(xh_ref[...], w_ref, b_ref, c_ref[...], h_pad)
    h_ref[...] = h_new
    c_ref[...] = c_new

    # Vocab projection (lane-dense, padded-V store).
    pred = jnp.dot(h_new, wfc_ref[...], preferred_element_type=jnp.float32) + bfc_ref[...]
    pred_ref[0] = pred

    # Greedy next token as a one-hot (first argmax over the real vocab columns).
    col = jax.lax.broadcasted_iota(jnp.int32, pred.shape, 1)
    colf = col.astype(jnp.float32)
    masked = jnp.where(col < v_real, pred, -jnp.inf)
    m = jnp.max(masked, axis=-1, keepdims=True)
    idx = jnp.min(jnp.where(masked >= m, colf, float(v_pad)), axis=-1, keepdims=True)
    guess_oh = (colf == idx).astype(jnp.float32)

    # Teacher-forcing blend for the next step's input.
    teach = (tf_ref[s] > 0).astype(jnp.float32)
    x_ref[...] = teach * tgt_oh_ref[s + 1] + (1.0 - teach) * guess_oh


def _run_decoder(tf_flags, tgt_onehot, h0, c0, emb, w, b, wfc, bfc,
                 *, v_real, e_pad, h_pad):
    tgt_len, b_pad, v_pad = tgt_onehot.shape
    steps = tgt_len - 1
    kern = functools.partial(_decoder_kernel, e_pad=e_pad, h_pad=h_pad,
                             v_pad=v_pad, v_real=v_real)
    return pl.pallas_call(
        kern,
        out_shape=jax.ShapeDtypeStruct((steps, b_pad, v_pad), jnp.float32),
        grid_spec=pltpu.PrefetchScalarGridSpec(
            num_scalar_prefetch=1,                 # teacher-forcing flags -> SMEM
            grid=(steps,),
            in_specs=[
                pl.BlockSpec((tgt_len, b_pad, v_pad), lambda s, tf: (0, 0, 0)),
                pl.BlockSpec((b_pad, h_pad), lambda s, tf: (0, 0)),
                pl.BlockSpec((b_pad, h_pad), lambda s, tf: (0, 0)),
                pl.BlockSpec((v_pad, e_pad), lambda s, tf: (0, 0)),
                pl.BlockSpec(w.shape, lambda s, tf: (0, 0)),
                pl.BlockSpec(b.shape, lambda s, tf: (0, 0)),
                pl.BlockSpec((h_pad, v_pad), lambda s, tf: (0, 0)),
                pl.BlockSpec((1, v_pad), lambda s, tf: (0, 0)),
            ],
            out_specs=pl.BlockSpec((1, b_pad, v_pad), lambda s, tf: (s, 0, 0)),
            scratch_shapes=[
                pltpu.VMEM((b_pad, e_pad + h_pad), jnp.float32),  # [x | h]
                pltpu.VMEM((b_pad, h_pad), jnp.float32),          # h state
                pltpu.VMEM((b_pad, h_pad), jnp.float32),          # c state
                pltpu.VMEM((b_pad, v_pad), jnp.float32),          # current input one-hot
            ],
        ),
        compiler_params=pltpu.CompilerParams(
            dimension_semantics=("arbitrary",)),
    )(tf_flags, tgt_onehot, h0, c0, emb, w, b, wfc, bfc)


# ----------------------------------------------------------------------------
# Parameter packing / padding (host-side, once)
# ----------------------------------------------------------------------------
def _pack_lstm(wih_t, whh_t, b, e_pad, h_pad):
    """Stack [Wih; Whh] into one (e_pad+h_pad, 4*h_pad) matrix with each gate on
    its own lane-aligned 128-wide column block; pad bias the same way."""
    E = wih_t.shape[0]
    H = whh_t.shape[0]
    w = jnp.zeros((e_pad + h_pad, 4 * h_pad), jnp.float32)
    bb = jnp.zeros((1, 4 * h_pad), jnp.float32)
    for g in range(4):
        w = w.at[:E, g * h_pad:g * h_pad + H].set(wih_t[:, g * H:(g + 1) * H])
        w = w.at[e_pad:e_pad + H, g * h_pad:g * h_pad + H].set(whh_t[:, g * H:(g + 1) * H])
        bb = bb.at[:, g * h_pad:g * h_pad + H].set(b[:, g * H:(g + 1) * H])
    return w, bb


def pad_params(params):
    E = params["enc_emb"].shape[1]
    H = params["enc_whh_t"].shape[0]
    Vt = params["dec_bfc"].shape[1]
    e_pad = _round_up(E, LANE)
    h_pad = _round_up(H, LANE)
    v_pad = _round_up(Vt, LANE)

    enc_w, enc_b = _pack_lstm(params["enc_wih_t"], params["enc_whh_t"],
                              params["enc_b"], e_pad, h_pad)
    dec_w, dec_b = _pack_lstm(params["dec_wih_t"], params["dec_whh_t"],
                              params["dec_b"], e_pad, h_pad)

    enc_emb = jnp.zeros((params["enc_emb"].shape[0], e_pad), jnp.float32)
    enc_emb = enc_emb.at[:, :E].set(params["enc_emb"])
    dec_emb = jnp.zeros((v_pad, e_pad), jnp.float32)
    dec_emb = dec_emb.at[:params["dec_emb"].shape[0], :E].set(params["dec_emb"])
    wfc = jnp.zeros((h_pad, v_pad), jnp.float32).at[:H, :Vt].set(params["dec_wfc_t"])
    bfc = jnp.zeros((1, v_pad), jnp.float32).at[:, :Vt].set(params["dec_bfc"])

    return {"enc_emb": enc_emb, "enc_w": enc_w, "enc_b": enc_b,
            "dec_emb": dec_emb, "dec_w": dec_w, "dec_b": dec_b,
            "dec_wfc": wfc, "dec_bfc": bfc}


# ----------------------------------------------------------------------------
# Seq2Seq forward (mirrors the PyTorch module's forward), fully jitted
# ----------------------------------------------------------------------------
def _seq2seq_forward(pparams, source, target, tf_flags, *, output_size):
    src_len, batch = source.shape
    tgt_len = target.shape[0]
    b_pad = _round_up(batch, SUBLANE)
    e_pad = pparams["enc_emb"].shape[1]
    h_pad = pparams["enc_w"].shape[1] // 4
    v_pad = pparams["dec_wfc"].shape[1]

    # ---- Encoder ----
    src_p = jnp.pad(source, ((0, 0), (0, b_pad - batch)))
    x_emb_all = jnp.take(pparams["enc_emb"], src_p, axis=0)          # XLA glue gather
    h_enc, c_enc = _run_encoder(x_emb_all, pparams["enc_w"], pparams["enc_b"], h_pad)

    # ---- Decoder ----
    tgt_p = jnp.pad(target, ((0, 0), (0, b_pad - batch)))
    tgt_onehot = jax.nn.one_hot(tgt_p, v_pad, dtype=jnp.float32)     # (T, B_pad, V_pad)
    preds = _run_decoder(tf_flags, tgt_onehot, h_enc, c_enc,
                         pparams["dec_emb"], pparams["dec_w"], pparams["dec_b"],
                         pparams["dec_wfc"], pparams["dec_bfc"],
                         v_real=output_size, e_pad=e_pad, h_pad=h_pad)

    # outputs[0] stays zero, like torch.zeros(target_len, batch, vocab)
    out = jnp.concatenate([jnp.zeros((1, b_pad, v_pad), jnp.float32), preds], axis=0)
    return out[:, :batch, :output_size]


seq2seq_forward = jax.jit(_seq2seq_forward, static_argnames=("output_size",))


def make_teacher_force_flags(target_len, teacher_force_ratio=0.5, seed=0):
    """Host-side Python random draws, one per decoder step (same count/order as
    the PyTorch reference's random.random() calls)."""
    rng = random.Random(seed)
    return jnp.array([1 if rng.random() < teacher_force_ratio else 0
                      for _ in range(target_len - 1)], dtype=jnp.int32)


# ----------------------------------------------------------------------------
# Deterministic parameter init + pure-JAX reference (for validation)
# ----------------------------------------------------------------------------
def init_params(key, src_vocab, tgt_vocab, emb, hidden):
    ks = jax.random.split(key, 10)
    s = 0.1
    return {
        "enc_emb":   jax.random.normal(ks[0], (src_vocab, emb), jnp.float32) * s,
        "enc_wih_t": jax.random.normal(ks[1], (emb, 4 * hidden), jnp.float32) * s,
        "enc_whh_t": jax.random.normal(ks[2], (hidden, 4 * hidden), jnp.float32) * s,
        "enc_b":     jax.random.normal(ks[3], (1, 4 * hidden), jnp.float32) * s,
        "dec_emb":   jax.random.normal(ks[4], (tgt_vocab, emb), jnp.float32) * s,
        "dec_wih_t": jax.random.normal(ks[5], (emb, 4 * hidden), jnp.float32) * s,
        "dec_whh_t": jax.random.normal(ks[6], (hidden, 4 * hidden), jnp.float32) * s,
        "dec_b":     jax.random.normal(ks[7], (1, 4 * hidden), jnp.float32) * s,
        "dec_wfc_t": jax.random.normal(ks[8], (hidden, tgt_vocab), jnp.float32) * s,
        "dec_bfc":   jax.random.normal(ks[9], (1, tgt_vocab), jnp.float32) * s,
    }


def reference_forward(params, source, target, tf_flags):
    """Plain-jnp reference of the same forward (unpadded), for validation."""
    src_len, batch = source.shape
    tgt_len = target.shape[0]
    H = params["enc_whh_t"].shape[0]
    V = params["dec_bfc"].shape[1]

    def cell(x_emb, h, c, wih, whh, b):
        gates = x_emb @ wih + h @ whh + b
        i = jax.nn.sigmoid(gates[:, :H]);         f = jax.nn.sigmoid(gates[:, H:2 * H])
        g = jnp.tanh(gates[:, 2 * H:3 * H]);      o = jax.nn.sigmoid(gates[:, 3 * H:])
        c = f * c + i * g
        return o * jnp.tanh(c), c

    h = jnp.zeros((batch, H), jnp.float32)
    c = jnp.zeros((batch, H), jnp.float32)
    for t in range(src_len):
        h, c = cell(params["enc_emb"][source[t]], h, c,
                    params["enc_wih_t"], params["enc_whh_t"], params["enc_b"])
    outs = [jnp.zeros((batch, V), jnp.float32)]
    x = target[0]
    for s in range(tgt_len - 1):
        h, c = cell(params["dec_emb"][x], h, c,
                    params["dec_wih_t"], params["dec_whh_t"], params["dec_b"])
        pred = h @ params["dec_wfc_t"] + params["dec_bfc"]
        outs.append(pred)
        best = jnp.argmax(pred, axis=1).astype(target.dtype)
        x = jnp.where(tf_flags[s] > 0, target[s + 1], best)
    return jnp.stack(outs, axis=0)


# ----------------------------------------------------------------------------
# Driver
# ----------------------------------------------------------------------------
if __name__ == "__main__":
    SRC_VOCAB, TGT_VOCAB = 32, 32
    EMB, HID = 16, 32
    SRC_LEN, TGT_LEN, BATCH = 8, 8, 4

    key = jax.random.PRNGKey(0)
    kp, ks, kt = jax.random.split(key, 3)

    raw_params = init_params(kp, SRC_VOCAB, TGT_VOCAB, EMB, HID)
    pparams = pad_params(raw_params)

    source = jax.random.randint(ks, (SRC_LEN, BATCH), 0, SRC_VOCAB, dtype=jnp.int32)
    target = jax.random.randint(kt, (TGT_LEN, BATCH), 0, TGT_VOCAB, dtype=jnp.int32)
    tf_flags = make_teacher_force_flags(TGT_LEN, teacher_force_ratio=0.5, seed=0)

    outputs = seq2seq_forward(pparams, source, target, tf_flags, output_size=TGT_VOCAB)
    jax.block_until_ready(outputs)

    assert outputs.shape == (TGT_LEN, BATCH, TGT_VOCAB)
    assert outputs.dtype == jnp.float32
    assert bool(jnp.all(outputs[0] == 0.0))
    assert bool(jnp.all(jnp.isfinite(outputs)))

    # Numerical validation against a pure-JAX reference under full teacher
    # forcing (tie-free path, exercises embedding / LSTM / FC / packing).
    all_teach = jnp.ones((TGT_LEN - 1,), jnp.int32)
    got = seq2seq_forward(pparams, source, target, all_teach, output_size=TGT_VOCAB)
    with jax.default_matmul_precision("highest"):
        want = reference_forward(raw_params, source, target, all_teach)
    max_err = float(jnp.max(jnp.abs(got - want)))
    assert bool(jnp.allclose(got, want, atol=2e-3, rtol=2e-3)), max_err

    print("KERNEL_OK")
</pallas_src>

<mosaic_0001>
module attributes {stable_mosaic.version = 11 : i64} {
  func.func @_encoder_kernel(%arg0: i32, %arg1: memref<1x8x128xf32, #tpu.memory_space<vmem>>, %arg2: memref<256x512xf32, #tpu.memory_space<vmem>>, %arg3: memref<1x512xf32, #tpu.memory_space<vmem>>, %arg4: memref<8x128xf32, #tpu.memory_space<vmem>>, %arg5: memref<8x128xf32, #tpu.memory_space<vmem>>, %arg6: memref<8x256xf32, #tpu.memory_space<vmem>>, %arg7: memref<8x128xf32, #tpu.memory_space<vmem>>, %arg8: memref<8x128xf32, #tpu.memory_space<vmem>>) attributes {dimension_semantics = [#tpu.dimension_semantics<arbitrary>], iteration_bounds = array<i64: 8>, scalar_prefetch = 0 : i64, scratch_operands = 3 : i64, tpu.core_type = #tpu.core_type<tc>, window_params = [{transform_indices = @transform_0, window_bounds = array<i64: 1, 8, 128>}, {pipeline_mode = #tpu.pipeline_mode<synchronous>, transform_indices = @transform_1, window_bounds = array<i64: 256, 512>}, {pipeline_mode = #tpu.pipeline_mode<synchronous>, transform_indices = @transform_2, window_bounds = array<i64: 1, 512>}, {pipeline_mode = #tpu.pipeline_mode<synchronous>, transform_indices = @transform_3, window_bounds = array<i64: 8, 128>}, {pipeline_mode = #tpu.pipeline_mode<synchronous>, transform_indices = @transform_4, window_bounds = array<i64: 8, 128>}]} {
    %c0_i32 = arith.constant 0 : i32
    %0 = arith.cmpi eq, %arg0, %c0_i32 : i32
    %1 = arith.extui %0 : i1 to i32
    %c0_i32_0 = arith.constant 0 : i32
    %2 = arith.cmpi ne, %1, %c0_i32_0 : i32
    scf.if %2 {
      %cst_24 = arith.constant 0.000000e+00 : f32
      %45 = vector.broadcast %cst_24 : f32 to vector<8x128xf32>
      %c0_25 = arith.constant 0 : index
      %c0_26 = arith.constant 0 : index
      %46 = vector.load %arg7[%c0_25, %c0_26] : memref<8x128xf32, #tpu.memory_space<vmem>>, vector<8x128xf32>
      tpu.vector_store %arg7[%c0_25, %c0_26], %45 {strides = array<i32>} : memref<8x128xf32, #tpu.memory_space<vmem>>, vector<8x128xf32>,
      %cst_27 = arith.constant 0.000000e+00 : f32
      %47 = vector.broadcast %cst_27 : f32 to vector<8x128xf32>
      %c0_28 = arith.constant 0 : index
      %c0_29 = arith.constant 0 : index
      %48 = vector.load %arg8[%c0_28, %c0_29] : memref<8x128xf32, #tpu.memory_space<vmem>>, vector<8x128xf32>
      tpu.vector_store %arg8[%c0_28, %c0_29], %47 {strides = array<i32>} : memref<8x128xf32, #tpu.memory_space<vmem>>, vector<8x128xf32>,
    } else {
    }
    %c0 = arith.constant 0 : index
    %c0_1 = arith.constant 0 : index
    %c0_2 = arith.constant 0 : index
    %3 = vector.load %arg1[%c0, %c0_1, %c0_2] : memref<1x8x128xf32, #tpu.memory_space<vmem>>, vector<1x8x128xf32>
    %4 = vector.shape_cast %3 : vector<1x8x128xf32> to vector<8x128xf32>
    %c0_3 = arith.constant 0 : index
    %c0_4 = arith.constant 0 : index
    %5 = vector.load %arg6[%c0_3, %c0_4] : memref<8x256xf32, #tpu.memory_space<vmem>>, vector<8x128xf32>
    tpu.vector_store %arg6[%c0_3, %c0_4], %4 {strides = array<i32>} : memref<8x256xf32, #tpu.memory_space<vmem>>, vector<8x128xf32>,
    %c0_5 = arith.constant 0 : index
    %c0_6 = arith.constant 0 : index
    %6 = vector.load %arg7[%c0_5, %c0_6] : memref<8x128xf32, #tpu.memory_space<vmem>>, vector<8x128xf32>
    %c0_7 = arith.constant 0 : index
    %c128 = arith.constant 128 : index
    %7 = vector.load %arg6[%c0_7, %c128] : memref<8x256xf32, #tpu.memory_space<vmem>>, vector<8x128xf32>
    tpu.vector_store %arg6[%c0_7, %c128], %6 {strides = array<i32>} : memref<8x256xf32, #tpu.memory_space<vmem>>, vector<8x128xf32>,
    %c0_8 = arith.constant 0 : index
    %c0_9 = arith.constant 0 : index
    %8 = vector.load %arg6[%c0_8, %c0_9] : memref<8x256xf32, #tpu.memory_space<vmem>>, vector<8x256xf32>
    %c0_10 = arith.constant 0 : index
    %c0_11 = arith.constant 0 : index
    %9 = vector.load %arg8[%c0_10, %c0_11] : memref<8x128xf32, #tpu.memory_space<vmem>>, vector<8x128xf32>
    %c0_12 = arith.constant 0 : index
    %c0_13 = arith.constant 0 : index
    %10 = vector.load %arg2[%c0_12, %c0_13] : memref<256x512xf32, #tpu.memory_space<vmem>>, vector<256x512xf32>
    %cst = arith.constant dense<0.000000e+00> : vector<8x512xf32>
    %11 = tpu.matmul %8, %10, %cst {dimension_numbers = #tpu.dot_dimension_numbers<[1], [0], [0], [1], [0, 0, 1, 1], [], []>} : vector<8x256xf32>, vector<256x512xf32>, vector<8x512xf32> -> vector<8x512xf32>
    %c0_14 = arith.constant 0 : index
    %c0_15 = arith.constant 0 : index
    %12 = vector.load %arg3[%c0_14, %c0_15] : memref<1x512xf32, #tpu.memory_space<vmem>>, vector<1x512xf32>
    %13 = vector.broadcast %12 : vector<1x512xf32> to vector<8x512xf32>
    %14 = arith.addf %11, %13 : vector<8x512xf32>
    %15 = vector.extract_strided_slice %14 {offsets = [0, 0], sizes = [8, 128], strides = [1, 1]} : vector<8x512xf32> to vector<8x128xf32>
    %16 = arith.negf %15 : vector<8x128xf32>
    %17 = math.exp %16 : vector<8x128xf32>
    %cst_16 = arith.constant 1.000000e+00 : f32
    %18 = vector.broadcast %cst_16 : f32 to vector<8x128xf32>
    %19 = arith.addf %18, %17 : vector<8x128xf32>
    %20 = arith.divf %18, %19 : vector<8x128xf32>
    %21 = vector.extract_strided_slice %14 {offsets = [0, 128], sizes = [8, 128], strides = [1, 1]} : vector<8x512xf32> to vector<8x128xf32>
    %22 = arith.negf %21 : vector<8x128xf32>
    %23 = math.exp %22 : vector<8x128xf32>
    %cst_17 = arith.constant 1.000000e+00 : f32
    %24 = vector.broadcast %cst_17 : f32 to vector<8x128xf32>
    %25 = arith.addf %24, %23 : vector<8x128xf32>
    %26 = arith.divf %24, %25 : vector<8x128xf32>
    %27 = vector.extract_strided_slice %14 {offsets = [0, 256], sizes = [8, 128], strides = [1, 1]} : vector<8x512xf32> to vector<8x128xf32>
    %28 = math.tanh %27 : vector<8x128xf32>
    %29 = vector.extract_strided_slice %14 {offsets = [0, 384], sizes = [8, 128], strides = [1, 1]} : vector<8x512xf32> to vector<8x128xf32>
    %30 = arith.negf %29 : vector<8x128xf32>
    %31 = math.exp %30 : vector<8x128xf32>
    %cst_18 = arith.constant 1.000000e+00 : f32
    %32 = vector.broadcast %cst_18 : f32 to vector<8x128xf32>
    %33 = arith.addf %32, %31 : vector<8x128xf32>
    %34 = arith.divf %32, %33 : vector<8x128xf32>
    %35 = arith.mulf %26, %9 : vector<8x128xf32>
    %36 = arith.mulf %20, %28 : vector<8x128xf32>
    %37 = arith.addf %35, %36 : vector<8x128xf32>
    %38 = math.tanh %37 : vector<8x128xf32>
    %39 = arith.mulf %34, %38 : vector<8x128xf32>
    %c0_19 = arith.constant 0 : index
    %c0_20 = arith.constant 0 : index
    %40 = vector.load %arg7[%c0_19, %c0_20] : memref<8x128xf32, #tpu.memory_space<vmem>>, vector<8x128xf32>
    tpu.vector_store %arg7[%c0_19, %c0_20], %39 {strides = array<i32>} : memref<8x128xf32, #tpu.memory_space<vmem>>, vector<8x128xf32>,
    %c0_21 = arith.constant 0 : index
    %c0_22 = arith.constant 0 : index
    %41 = vector.load %arg8[%c0_21, %c0_22] : memref<8x128xf32, #tpu.memory_space<vmem>>, vector<8x128xf32>
    tpu.vector_store %arg8[%c0_21, %c0_22], %37 {strides = array<i32>} : memref<8x128xf32, #tpu.memory_space<vmem>>, vector<8x128xf32>,
    %c7_i32 = arith.constant 7 : i32
    %42 = arith.cmpi eq, %arg0, %c7_i32 : i32
    %43 = arith.extui %42 : i1 to i32
    %c0_i32_23 = arith.constant 0 : i32
    %44 = arith.cmpi ne, %43, %c0_i32_23 : i32
    scf.if %44 {
      %c0_24 = arith.constant 0 : index
      %c0_25 = arith.constant 0 : index
      %45 = vector.load %arg4[%c0_24, %c0_25] : memref<8x128xf32, #tpu.memory_space<vmem>>, vector<8x128xf32>
      tpu.vector_store %arg4[%c0_24, %c0_25], %39 {strides = array<i32>} : memref<8x128xf32, #tpu.memory_space<vmem>>, vector<8x128xf32>,
      %c0_26 = arith.constant 0 : index
      %c0_27 = arith.constant 0 : index
      %46 = vector.load %arg5[%c0_26, %c0_27] : memref<8x128xf32, #tpu.memory_space<vmem>>, vector<8x128xf32>
      tpu.vector_store %arg5[%c0_26, %c0_27], %37 {strides = array<i32>} : memref<8x128xf32, #tpu.memory_space<vmem>>, vector<8x128xf32>,
    } else {
    }
    return
  }
  func.func @transform_0(%arg0: i32) -> (i32, i32, i32) {
    %c0_i32 = arith.constant 0 : i32
    %c0_i32_0 = arith.constant 0 : i32
    %c0_i32_1 = arith.constant 0 : i32
    return %arg0, %c0_i32, %c0_i32_0 : i32, i32, i32
  }
  func.func @transform_1(%arg0: i32) -> (i32, i32) {
    %c0_i32 = arith.constant 0 : i32
    %c0_i32_0 = arith.constant 0 : i32
    %c0_i32_1 = arith.constant 0 : i32
    return %c0_i32, %c0_i32_0 : i32, i32
  }
  func.func @transform_2(%arg0: i32) -> (i32, i32) {
    %c0_i32 = arith.constant 0 : i32
    %c0_i32_0 = arith.constant 0 : i32
    %c0_i32_1 = arith.constant 0 : i32
    return %c0_i32, %c0_i32_0 : i32, i32
  }
  func.func @transform_3(%arg0: i32) -> (i32, i32) {
    %c0_i32 = arith.constant 0 : i32
    %c0_i32_0 = arith.constant 0 : i32
    %c0_i32_1 = arith.constant 0 : i32
    return %c0_i32, %c0_i32_0 : i32, i32
  }
  func.func @transform_4(%arg0: i32) -> (i32, i32) {
    %c0_i32 = arith.constant 0 : i32
    %c0_i32_0 = arith.constant 0 : i32
    %c0_i32_1 = arith.constant 0 : i32
    return %c0_i32, %c0_i32_0 : i32, i32
  }
}

module attributes {stable_mosaic.version = 11 : i64} {
  func.func @_decoder_kernel(%arg0: i32, %arg1: memref<7xi32, #tpu.memory_space<smem>>, %arg2: memref<8x8x128xf32, #tpu.memory_space<vmem>>, %arg3: memref<8x128xf32, #tpu.memory_space<vmem>>, %arg4: memref<8x128xf32, #tpu.memory_space<vmem>>, %arg5: memref<128x128xf32, #tpu.memory_space<vmem>>, %arg6: memref<256x512xf32, #tpu.memory_space<vmem>>, %arg7: memref<1x512xf32, #tpu.memory_space<vmem>>, %arg8: memref<128x128xf32, #tpu.memory_space<vmem>>, %arg9: memref<1x128xf32, #tpu.memory_space<vmem>>, %arg10: memref<1x8x128xf32, #tpu.memory_space<vmem>>, %arg11: memref<8x256xf32, #tpu.memory_space<vmem>>, %arg12: memref<8x128xf32, #tpu.memory_space<vmem>>, %arg13: memref<8x128xf32, #tpu.memory_space<vmem>>, %arg14: memref<8x128xf32, #tpu.memory_space<vmem>>) attributes {dimension_semantics = [#tpu.dimension_semantics<arbitrary>], iteration_bounds = array<i64: 7>, scalar_prefetch = 1 : i64, scratch_operands = 4 : i64, tpu.core_type = #tpu.core_type<tc>, window_params = [{pipeline_mode = #tpu.pipeline_mode<synchronous>, transform_indices = @transform_0, window_bounds = array<i64: 8, 8, 128>}, {pipeline_mode = #tpu.pipeline_mode<synchronous>, transform_indices = @transform_1, window_bounds = array<i64: 8, 128>}, {pipeline_mode = #tpu.pipeline_mode<synchronous>, transform_indices = @transform_2, window_bounds = array<i64: 8, 128>}, {pipeline_mode = #tpu.pipeline_mode<synchronous>, transform_indices = @transform_3, window_bounds = array<i64: 128, 128>}, {pipeline_mode = #tpu.pipeline_mode<synchronous>, transform_indices = @transform_4, window_bounds = array<i64: 256, 512>}, {pipeline_mode = #tpu.pipeline_mode<synchronous>, transform_indices = @transform_5, window_bounds = array<i64: 1, 512>}, {pipeline_mode = #tpu.pipeline_mode<synchronous>, transform_indices = @transform_6, window_bounds = array<i64: 128, 128>}, {pipeline_mode = #tpu.pipeline_mode<synchronous>, transform_indices = @transform_7, window_bounds = array<i64: 1, 128>}, {transform_indices = @transform_8, window_bounds = array<i64: 1, 8, 128>}]} {
    %c0_i32 = arith.constant 0 : i32
    %0 = arith.cmpi eq, %arg0, %c0_i32 : i32
    %1 = arith.extui %0 : i1 to i32
    %c0_i32_0 = arith.constant 0 : i32
    %2 = arith.cmpi ne, %1, %c0_i32_0 : i32
    scf.if %2 {
      %c0_43 = arith.constant 0 : index
      %c0_44 = arith.constant 0 : index
      %85 = vector.load %arg3[%c0_43, %c0_44] : memref<8x128xf32, #tpu.memory_space<vmem>>, vector<8x128xf32>
      %c0_45 = arith.constant 0 : index
      %c0_46 = arith.constant 0 : index
      %86 = vector.load %arg12[%c0_45, %c0_46] : memref<8x128xf32, #tpu.memory_space<vmem>>, vector<8x128xf32>
      tpu.vector_store %arg12[%c0_45, %c0_46], %85 {strides = array<i32>} : memref<8x128xf32, #tpu.memory_space<vmem>>, vector<8x128xf32>,
      %c0_47 = arith.constant 0 : index
      %c0_48 = arith.constant 0 : index
      %87 = vector.load %arg4[%c0_47, %c0_48] : memref<8x128xf32, #tpu.memory_space<vmem>>, vector<8x128xf32>
      %c0_49 = arith.constant 0 : index
      %c0_50 = arith.constant 0 : index
      %88 = vector.load %arg13[%c0_49, %c0_50] : memref<8x128xf32, #tpu.memory_space<vmem>>, vector<8x128xf32>
      tpu.vector_store %arg13[%c0_49, %c0_50], %87 {strides = array<i32>} : memref<8x128xf32, #tpu.memory_space<vmem>>, vector<8x128xf32>,
      %c0_51 = arith.constant 0 : index
      %c0_52 = arith.constant 0 : index
      %c0_53 = arith.constant 0 : index
      %89 = vector.load %arg2[%c0_51, %c0_52, %c0_53] : memref<8x8x128xf32, #tpu.memory_space<vmem>>, vector<1x8x128xf32>
      %90 = vector.shape_cast %89 : vector<1x8x128xf32> to vector<8x128xf32>
      %c0_54 = arith.constant 0 : index
      %c0_55 = arith.constant 0 : index
      %91 = vector.load %arg14[%c0_54, %c0_55] : memref<8x128xf32, #tpu.memory_space<vmem>>, vector<8x128xf32>
      tpu.vector_store %arg14[%c0_54, %c0_55], %90 {strides = array<i32>} : memref<8x128xf32, #tpu.memory_space<vmem>>, vector<8x128xf32>,
    } else {
    }
    %c0 = arith.constant 0 : index
    %c0_1 = arith.constant 0 : index
    %3 = vector.load %arg14[%c0, %c0_1] : memref<8x128xf32, #tpu.memory_space<vmem>>, vector<8x128xf32>
    %c0_2 = arith.constant 0 : index
    %c0_3 = arith.constant 0 : index
    %4 = vector.load %arg5[%c0_2, %c0_3] : memref<128x128xf32, #tpu.memory_space<vmem>>, vector<128x128xf32>
    %cst = arith.constant dense<0.000000e+00> : vector<8x128xf32>
    %5 = tpu.matmul %3, %4, %cst {dimension_numbers = #tpu.dot_dimension_numbers<[1], [0], [0], [1], [0, 0, 1, 1], [], []>} : vector<8x128xf32>, vector<128x128xf32>, vector<8x128xf32> -> vector<8x128xf32>
    %c0_4 = arith.constant 0 : index
    %c0_5 = arith.constant 0 : index
    %6 = vector.load %arg11[%c0_4, %c0_5] : memref<8x256xf32, #tpu.memory_space<vmem>>, vector<8x128xf32>
    tpu.vector_store %arg11[%c0_4, %c0_5], %5 {strides = array<i32>} : memref<8x256xf32, #tpu.memory_space<vmem>>, vector<8x128xf32>,
    %c0_6 = arith.constant 0 : index
    %c0_7 = arith.constant 0 : index
    %7 = vector.load %arg12[%c0_6, %c0_7] : memref<8x128xf32, #tpu.memory_space<vmem>>, vector<8x128xf32>
    %c0_8 = arith.constant 0 : index
    %c128 = arith.constant 128 : index
    %8 = vector.load %arg11[%c0_8, %c128] : memref<8x256xf32, #tpu.memory_space<vmem>>, vector<8x128xf32>
    tpu.vector_store %arg11[%c0_8, %c128], %7 {strides = array<i32>} : memref<8x256xf32, #tpu.memory_space<vmem>>, vector<8x128xf32>,
    %c0_9 = arith.constant 0 : index
    %c0_10 = arith.constant 0 : index
    %9 = vector.load %arg11[%c0_9, %c0_10] : memref<8x256xf32, #tpu.memory_space<vmem>>, vector<8x256xf32>
    %c0_11 = arith.constant 0 : index
    %c0_12 = arith.constant 0 : index
    %10 = vector.load %arg13[%c0_11, %c0_12] : memref<8x128xf32, #tpu.memory_space<vmem>>, vector<8x128xf32>
    %c0_13 = arith.constant 0 : index
    %c0_14 = arith.constant 0 : index
    %11 = vector.load %arg6[%c0_13, %c0_14] : memref<256x512xf32, #tpu.memory_space<vmem>>, vector<256x512xf32>
    %cst_15 = arith.constant dense<0.000000e+00> : vector<8x512xf32>
    %12 = tpu.matmul %9, %11, %cst_15 {dimension_numbers = #tpu.dot_dimension_numbers<[1], [0], [0], [1], [0, 0, 1, 1], [], []>} : vector<8x256xf32>, vector<256x512xf32>, vector<8x512xf32> -> vector<8x512xf32>
    %c0_16 = arith.constant 0 : index
    %c0_17 = arith.constant 0 : index
    %13 = vector.load %arg7[%c0_16, %c0_17] : memref<1x512xf32, #tpu.memory_space<vmem>>, vector<1x512xf32>
    %14 = vector.broadcast %13 : vector<1x512xf32> to vector<8x512xf32>
    %15 = arith.addf %12, %14 : vector<8x512xf32>
    %16 = vector.extract_strided_slice %15 {offsets = [0, 0], sizes = [8, 128], strides = [1, 1]} : vector<8x512xf32> to vector<8x128xf32>
    %17 = arith.negf %16 : vector<8x128xf32>
    %18 = math.exp %17 : vector<8x128xf32>
    %cst_18 = arith.constant 1.000000e+00 : f32
    %19 = vector.broadcast %cst_18 : f32 to vector<8x128xf32>
    %20 = arith.addf %19, %18 : vector<8x128xf32>
    %21 = arith.divf %19, %20 : vector<8x128xf32>
    %22 = vector.extract_strided_slice %15 {offsets = [0, 128], sizes = [8, 128], strides = [1, 1]} : vector<8x512xf32> to vector<8x128xf32>
    %23 = arith.negf %22 : vector<8x128xf32>
    %24 = math.exp %23 : vector<8x128xf32>
    %cst_19 = arith.constant 1.000000e+00 : f32
    %25 = vector.broadcast %cst_19 : f32 to vector<8x128xf32>
    %26 = arith.addf %25, %24 : vector<8x128xf32>
    %27 = arith.divf %25, %26 : vector<8x128xf32>
    %28 = vector.extract_strided_slice %15 {offsets = [0, 256], sizes = [8, 128], strides = [1, 1]} : vector<8x512xf32> to vector<8x128xf32>
    %29 = math.tanh %28 : vector<8x128xf32>
    %30 = vector.extract_strided_slice %15 {offsets = [0, 384], sizes = [8, 128], strides = [1, 1]} : vector<8x512xf32> to vector<8x128xf32>
    %31 = arith.negf %30 : vector<8x128xf32>
    %32 = math.exp %31 : vector<8x128xf32>
    %cst_20 = arith.constant 1.000000e+00 : f32
    %33 = vector.broadcast %cst_20 : f32 to vector<8x128xf32>
    %34 = arith.addf %33, %32 : vector<8x128xf32>
    %35 = arith.divf %33, %34 : vector<8x128xf32>
    %36 = arith.mulf %27, %10 : vector<8x128xf32>
    %37 = arith.mulf %21, %29 : vector<8x128xf32>
    %38 = arith.addf %36, %37 : vector<8x128xf32>
    %39 = math.tanh %38 : vector<8x128xf32>
    %40 = arith.mulf %35, %39 : vector<8x128xf32>
    %c0_21 = arith.constant 0 : index
    %c0_22 = arith.constant 0 : index
    %41 = vector.load %arg12[%c0_21, %c0_22] : memref<8x128xf32, #tpu.memory_space<vmem>>, vector<8x128xf32>
    tpu.vector_store %arg12[%c0_21, %c0_22], %40 {strides = array<i32>} : memref<8x128xf32, #tpu.memory_space<vmem>>, vector<8x128xf32>,
    %c0_23 = arith.constant 0 : index
    %c0_24 = arith.constant 0 : index
    %42 = vector.load %arg13[%c0_23, %c0_24] : memref<8x128xf32, #tpu.memory_space<vmem>>, vector<8x128xf32>
    tpu.vector_store %arg13[%c0_23, %c0_24], %38 {strides = array<i32>} : memref<8x128xf32, #tpu.memory_space<vmem>>, vector<8x128xf32>,
    %c0_25 = arith.constant 0 : index
    %c0_26 = arith.constant 0 : index
    %43 = vector.load %arg8[%c0_25, %c0_26] : memref<128x128xf32, #tpu.memory_space<vmem>>, vector<128x128xf32>
    %cst_27 = arith.constant dense<0.000000e+00> : vector<8x128xf32>
    %44 = tpu.matmul %40, %43, %cst_27 {dimension_numbers = #tpu.dot_dimension_numbers<[1], [0], [0], [1], [0, 0, 1, 1], [], []>} : vector<8x128xf32>, vector<128x128xf32>, vector<8x128xf32> -> vector<8x128xf32>
    %c0_28 = arith.constant 0 : index
    %c0_29 = arith.constant 0 : index
    %45 = vector.load %arg9[%c0_28, %c0_29] : memref<1x128xf32, #tpu.memory_space<vmem>>, vector<1x128xf32>
    %46 = vector.broadcast %45 : vector<1x128xf32> to vector<8x128xf32>
    %47 = arith.addf %44, %46 : vector<8x128xf32>
    %c0_30 = arith.constant 0 : index
    %c0_31 = arith.constant 0 : index
    %c0_32 = arith.constant 0 : index
    %48 = vector.load %arg10[%c0_30, %c0_31, %c0_32] : memref<1x8x128xf32, #tpu.memory_space<vmem>>, vector<1x8x128xf32>
    %49 = vector.shape_cast %48 : vector<1x8x128xf32> to vector<8x128xf32>
    %50 = vector.shape_cast %47 : vector<8x128xf32> to vector<1x8x128xf32>
    tpu.vector_store %arg10[%c0_30, %c0_31, %c0_32], %50 {strides = array<i32>} : memref<1x8x128xf32, #tpu.memory_space<vmem>>, vector<1x8x128xf32>,
    %51 = tpu.iota {dimensions = array<i32: 1>} : vector<8x128xi32>
    %52 = arith.sitofp %51 : vector<8x128xi32> to vector<8x128xf32>
    %c32_i32 = arith.constant 32 : i32
    %53 = vector.broadcast %c32_i32 : i32 to vector<8x128xi32>
    %54 = arith.cmpi slt, %51, %53 : vector<8x128xi32>
    %cst_33 = arith.constant 0xFF800000 : f32
    %55 = vector.broadcast %cst_33 : f32 to vector<8x128xf32>
    %56 = arith.select %54, %47, %55 : vector<8x128xi1>, vector<8x128xf32>
    %cst_34 = arith.constant dense<0xFF800000> : vector<8xf32>
    %57 = vector.multi_reduction <maximumf>, %56, %cst_34 [1] : vector<8x128xf32> to vector<8xf32>
    %58 = vector.shape_cast %57 : vector<8xf32> to vector<8x1xf32>
    %59 = vector.broadcast %58 : vector<8x1xf32> to vector<8x128xf32>
    %60 = arith.cmpf oge, %56, %59 : vector<8x128xf32>
    %cst_35 = arith.constant 1.280000e+02 : f32
    %61 = vector.broadcast %cst_35 : f32 to vector<8x128xf32>
    %62 = arith.select %60, %52, %61 : vector<8x128xi1>, vector<8x128xf32>
    %cst_36 = arith.constant dense<0x7F800000> : vector<8xf32>
    %63 = vector.multi_reduction <minimumf>, %62, %cst_36 [1] : vector<8x128xf32> to vector<8xf32>
    %64 = vector.shape_cast %63 : vector<8xf32> to vector<8x1xf32>
    %65 = vector.broadcast %64 : vector<8x1xf32> to vector<8x128xf32>
    %66 = arith.cmpf oeq, %52, %65 : vector<8x128xf32>
    %67 = arith.extui %66 : vector<8x128xi1> to vector<8x128xi32>
    %68 = arith.sitofp %67 : vector<8x128xi32> to vector<8x128xf32>
    %69 = arith.index_cast %arg0 : i32 to index
    %70 = memref.load %arg1[%69] : memref<7xi32, #tpu.memory_space<smem>>
    %c0_i32_37 = arith.constant 0 : i32
    %71 = arith.cmpi sgt, %70, %c0_i32_37 : i32
    %72 = arith.extui %71 : i1 to i32
    %73 = arith.sitofp %72 : i32 to f32
    %c1_i32 = arith.constant 1 : i32
    %74 = arith.addi %arg0, %c1_i32 : i32
    %75 = arith.index_cast %74 : i32 to index
    %c0_38 = arith.constant 0 : index
    %c0_39 = arith.constant 0 : index
    %76 = vector.load %arg2[%75, %c0_38, %c0_39] : memref<8x8x128xf32, #tpu.memory_space<vmem>>, vector<1x8x128xf32>
    %77 = vector.shape_cast %76 : vector<1x8x128xf32> to vector<8x128xf32>
    %78 = vector.broadcast %73 : f32 to vector<8x128xf32>
    %79 = arith.mulf %78, %77 : vector<8x128xf32>
    %cst_40 = arith.constant 1.000000e+00 : f32
    %80 = arith.subf %cst_40, %73 : f32
    %81 = vector.broadcast %80 : f32 to vector<8x128xf32>
    %82 = arith.mulf %81, %68 : vector<8x128xf32>
    %83 = arith.addf %79, %82 : vector<8x128xf32>
    %c0_41 = arith.constant 0 : index
    %c0_42 = arith.constant 0 : index
    %84 = vector.load %arg14[%c0_41, %c0_42] : memref<8x128xf32, #tpu.memory_space<vmem>>, vector<8x128xf32>
    tpu.vector_store %arg14[%c0_41, %c0_42], %83 {strides = array<i32>} : memref<8x128xf32, #tpu.memory_space<vmem>>, vector<8x128xf32>,
    return
  }
  func.func @transform_0(%arg0: i32, %arg1: memref<7xi32, #tpu.memory_space<smem>>) -> (i32, i32, i32) {
    %c0_i32 = arith.constant 0 : i32
    %c0_i32_0 = arith.constant 0 : i32
    %c0_i32_1 = arith.constant 0 : i32
    %c0_i32_2 = arith.constant 0 : i32
    return %c0_i32, %c0_i32_0, %c0_i32_1 : i32, i32, i32
  }
  func.func @transform_1(%arg0: i32, %arg1: memref<7xi32, #tpu.memory_space<smem>>) -> (i32, i32) {
    %c0_i32 = arith.constant 0 : i32
    %c0_i32_0 = arith.constant 0 : i32
    %c0_i32_1 = arith.constant 0 : i32
    return %c0_i32, %c0_i32_0 : i32, i32
  }
  func.func @transform_2(%arg0: i32, %arg1: memref<7xi32, #tpu.memory_space<smem>>) -> (i32, i32) {
    %c0_i32 = arith.constant 0 : i32
    %c0_i32_0 = arith.constant 0 : i32
    %c0_i32_1 = arith.constant 0 : i32
    return %c0_i32, %c0_i32_0 : i32, i32
  }
  func.func @transform_3(%arg0: i32, %arg1: memref<7xi32, #tpu.memory_space<smem>>) -> (i32, i32) {
    %c0_i32 = arith.constant 0 : i32
    %c0_i32_0 = arith.constant 0 : i32
    %c0_i32_1 = arith.constant 0 : i32
    return %c0_i32, %c0_i32_0 : i32, i32
  }
  func.func @transform_4(%arg0: i32, %arg1: memref<7xi32, #tpu.memory_space<smem>>) -> (i32, i32) {
    %c0_i32 = arith.constant 0 : i32
    %c0_i32_0 = arith.constant 0 : i32
    %c0_i32_1 = arith.constant 0 : i32
    return %c0_i32, %c0_i32_0 : i32, i32
  }
  func.func @transform_5(%arg0: i32, %arg1: memref<7xi32, #tpu.memory_space<smem>>) -> (i32, i32) {
    %c0_i32 = arith.constant 0 : i32
    %c0_i32_0 = arith.constant 0 : i32
    %c0_i32_1 = arith.constant 0 : i32
    return %c0_i32, %c0_i32_0 : i32, i32
  }
  func.func @transform_6(%arg0: i32, %arg1: memref<7xi32, #tpu.memory_space<smem>>) -> (i32, i32) {
    %c0_i32 = arith.constant 0 : i32
    %c0_i32_0 = arith.constant 0 : i32
    %c0_i32_1 = arith.constant 0 : i32
    return %c0_i32, %c0_i32_0 : i32, i32
  }
  func.func @transform_7(%arg0: i32, %arg1: memref<7xi32, #tpu.memory_space<smem>>) -> (i32, i32) {
    %c0_i32 = arith.constant 0 : i32
    %c0_i32_0 = arith.constant 0 : i32
    %c0_i32_1 = arith.constant 0 : i32
    return %c0_i32, %c0_i32_0 : i32, i32
  }
  func.func @transform_8(%arg0: i32, %arg1: memref<7xi32, #tpu.memory_space<smem>>) -> (i32, i32, i32) {
    %c0_i32 = arith.constant 0 : i32
    %c0_i32_0 = arith.constant 0 : i32
    %c0_i32_1 = arith.constant 0 : i32
    return %arg0, %c0_i32, %c0_i32_0 : i32, i32, i32
  }
}

</mosaic_0001>

<llo_original>
// kernel: _seq2seq_forward.2
$region0: #{_seq2seq_forward.2}
  #allocation0 [shape = 'u32[]', space=smem, size = 0x4, offset = 0x4, fixed_abs, tag = 'smem constant byte address 0x4 - core index']
  #allocation1 [shape = 'u32[144,128]{1,0:T(1,128)}', space=vmem, size = 0x12000, scoped, tag = 'internal scratch']
  #allocation2 [shape = 'f32[8,256]{1,0:T(8,128)}', space=vmem, size = 0x2000, scoped, tag = 'scratch operand']
  #allocation3 [shape = 'f32[8,128]{1,0:T(8,128)}', space=vmem, size = 0x1000, scoped, tag = 'scratch operand']
  #allocation4 [shape = 'f32[8,128]{1,0:T(8,128)}', space=vmem, size = 0x1000, scoped, tag = 'scratch operand']
  %s0 = inlined_call_operand.vmem [shape: f32[8,8,128], index: 0, kind: input, shape index: {}]
  %s1 = inlined_call_operand.hbm [shape: f32[256,512], index: 1, kind: input, shape index: {}]
  %s2 = inlined_call_operand.vmem [shape: f32[1,512], index: 2, kind: input, shape index: {}]
  %s3 = inlined_call_operand.vmem [shape: f32[8,128], index: 3, kind: output, shape index: {0}]
  %s4 = inlined_call_operand.vmem [shape: f32[8,128], index: 4, kind: output, shape index: {1}]
  %5 = xla_tuple %s3, %s4
  %s6 = sld [smem:[#allocation0]]
  $region65: #{_seq2seq_forward.2} parent=0
    _
  %s8 = ssub.s32 1, %s6
  %s9 = scalar_select 0, %s8, %s6
  $region1: #{_seq2seq_forward.2} parent=0
    #allocation5 [shape = 'u8[524288]{0}', space=vmem, size = 0x80000, scoped, tag = 'input window, operand 1, single buffered']
    #allocation6 [shape = 's32[2]{0}', space=sflag, size = 0x8, scoped, tag = 'scoped memory for _seq2seq_forward.2']
    %10 = vsyncpa [#allocation6], 0
    loop: start=0, step=1, limit=10
    $region2: #{_seq2seq_forward.2} parent=1 // loop_pre_header
      _
    $region3: #{_seq2seq_forward.2} parent=1 // loop_header
      %s12 = sphi 0, %s16
      %p13 = scmp.ge.s32.totalorder %s12, 10
      %s22 = sphi 0, %s24
      %s25 = sphi 0, %s22
      %s26 = sphi 0, %s25
      %s42 = sphi 0, %s26
      %s46 = sphi 0, %s46
      %s48 = sphi 0, %s46
      %s49 = sphi 0, %s48
      %s63 = sphi 0, %s49
      %s67 = sphi 0, %s67
      %s69 = sphi 0, %s67
      %s70 = sphi 0, %s69
      %s84 = sphi 0, %s70
      %s88 = sphi 0, %s88
      %s90 = sphi 0, %s88
      %s91 = sphi 0, %s90
      %s105 = sphi 0, %s91
      %s109 = sphi 0, %s109
      %s111 = sphi 0, %s109
      %s112 = sphi 0, %s111
      %s126 = sphi 0, %s112
    $region4: #{_seq2seq_forward.2} parent=1 // loop_header_branch
      %15 = sbr.rel (%p13) target = $region8
    $region5: #{_seq2seq_forward.2} parent=1 // loop_body
      %s17 = ssub.s32 %s12, 1
      %s18 = ssub.s32 %s12, 2
      %s19 = sadd.s32 %s12, 1
      %s20 = ssub.s32 %s12, %s19
      %p21 = scmp.eq.s32.totalorder %s20, 0
      %s23 = sadd.s32 %s22, 1
      %s24 = scalar_select %p21, %s22, %s23
      %p27 = pneg %p21
      %p28 = scmp.eq.s32.totalorder %s12, 7
      %p29 = por %p27, %p28
      %p30 = scmp.ne.s32.totalorder %s22, %s25
      %p31 = scmp.eq.s32.totalorder %s12, 0
      %p32 = por %p30, %p31
      %p33 = scmp.ne.s32.totalorder %s22, %s25
      %p34 = scmp.eq.s32.totalorder %s17, 7
      %p35 = por %p33, %p34
      %p36 = scmp.ne.s32.totalorder %s25, %s26
      %p37 = scmp.eq.s32.totalorder %s17, 0
      %p38 = por %p36, %p37
      %p39 = scmp.ne.s32.totalorder %s25, %s26
      %p40 = scmp.eq.s32.totalorder %s18, 7
      %p41 = por %p39, %p40
      %p43 = scmp.ne.s32.totalorder %s26, %s42
      %p44 = scmp.eq.s32.totalorder %s18, 0
      %p45 = por %p43, %p44
      %s47 = sadd.s32 %s46, 1
      %p50 = scmp.eq.s32.totalorder %s12, 7
      %p51 = scmp.ne.s32.totalorder %s46, %s48
      %p52 = scmp.eq.s32.totalorder %s12, 0
      %p53 = por %p51, %p52
      %p54 = scmp.ne.s32.totalorder %s46, %s48
      %p55 = scmp.eq.s32.totalorder %s17, 7
      %p56 = por %p54, %p55
      %p57 = scmp.ne.s32.totalorder %s48, %s49
      %p58 = scmp.eq.s32.totalorder %s17, 0
      %p59 = por %p57, %p58
      %p60 = scmp.ne.s32.totalorder %s48, %s49
      %p61 = scmp.eq.s32.totalorder %s18, 7
      %p62 = por %p60, %p61
      %p64 = scmp.ne.s32.totalorder %s49, %s63
      %p65 = scmp.eq.s32.totalorder %s18, 0
      %p66 = por %p64, %p65
      %s68 = sadd.s32 %s67, 1
      %p71 = scmp.eq.s32.totalorder %s12, 7
      %p72 = scmp.ne.s32.totalorder %s67, %s69
      %p73 = scmp.eq.s32.totalorder %s12, 0
      %p74 = por %p72, %p73
      %p75 = scmp.ne.s32.totalorder %s67, %s69
      %p76 = scmp.eq.s32.totalorder %s17, 7
      %p77 = por %p75, %p76
      %p78 = scmp.ne.s32.totalorder %s69, %s70
      %p79 = scmp.eq.s32.totalorder %s17, 0
      %p80 = por %p78, %p79
      %p81 = scmp.ne.s32.totalorder %s69, %s70
      %p82 = scmp.eq.s32.totalorder %s18, 7
      %p83 = por %p81, %p82
      %p85 = scmp.ne.s32.totalorder %s70, %s84
      %p86 = scmp.eq.s32.totalorder %s18, 0
      %p87 = por %p85, %p86
      %s89 = sadd.s32 %s88, 1
      %p92 = scmp.eq.s32.totalorder %s12, 7
      %p93 = scmp.ne.s32.totalorder %s88, %s90
      %p94 = scmp.eq.s32.totalorder %s12, 0
      %p95 = por %p93, %p94
      %p96 = scmp.ne.s32.totalorder %s88, %s90
      %p97 = scmp.eq.s32.totalorder %s17, 7
      %p98 = por %p96, %p97
      %p99 = scmp.ne.s32.totalorder %s90, %s91
      %p100 = scmp.eq.s32.totalorder %s17, 0
      %p101 = por %p99, %p100
      %p102 = scmp.ne.s32.totalorder %s90, %s91
      %p103 = scmp.eq.s32.totalorder %s18, 7
      %p104 = por %p102, %p103
      %p106 = scmp.ne.s32.totalorder %s91, %s105
      %p107 = scmp.eq.s32.totalorder %s18, 0
      %p108 = por %p106, %p107
      %s110 = sadd.s32 %s109, 1
      %p113 = scmp.eq.s32.totalorder %s12, 7
      %p114 = scmp.ne.s32.totalorder %s109, %s111
      %p115 = scmp.eq.s32.totalorder %s12, 0
      %p116 = por %p114, %p115
      %p117 = scmp.ne.s32.totalorder %s109, %s111
      %p118 = scmp.eq.s32.totalorder %s17, 7
      %p119 = por %p117, %p118
      %p120 = scmp.ne.s32.totalorder %s111, %s112
      %p121 = scmp.eq.s32.totalorder %s17, 0
      %p122 = por %p120, %p121
      %p123 = scmp.ne.s32.totalorder %s111, %s112
      %p124 = scmp.eq.s32.totalorder %s18, 7
      %p125 = por %p123, %p124
      %p127 = scmp.ne.s32.totalorder %s112, %s126
      %p128 = scmp.eq.s32.totalorder %s18, 0
      %p129 = por %p127, %p128
      %p130 = scmp.le.s32.totalorder 1, %s12
      %p131 = scmp.lt.s32.totalorder %s12, 9
      %p132 = pnand %p130, %p131
      %p133 = pneg %p132
      // Predicated region
      $region9: #{_seq2seq_forward.2} parent=5 // pred_check
        _
      $region10: #{_seq2seq_forward.2} parent=5 // pred_check_branch
        %135 = sbr.rel (%p132) target = $region12
      $region11: #{_seq2seq_forward.2} parent=5 // pred_region
        %s136 = ssub.s32 %s12, 1
        // Predicated region
        $region13: #{_seq2seq_forward.2} parent=11 // pred_check
          %p137 = pneg %p59
        $region14: #{_seq2seq_forward.2} parent=11 // pred_check_branch
          %139 = sbr.rel (%p137) target = $region16
        $region15: #{_seq2seq_forward.2} parent=11 // pred_region
          %s141 = ssub.s32 16384, 16384
          %142 = vsyncadd [#allocation6], %s141
          %s143 = sshll.u32 [#allocation5], 4
          %s144 = int_to_ptr.vmem [resolvable:$true] %s143
          %149 = dma.hbm_to_vmem [thread:$0]  %s1, 16384, %s144, [#allocation6], 512, 512, 32
        $region16: #{_seq2seq_forward.2} parent=11 // pred_fallthru
          _
        // Predicated region
        $region17: #{_seq2seq_forward.2} parent=11 // pred_check
          %p150 = pneg %p80
        $region18: #{_seq2seq_forward.2} parent=11 // pred_check_branch
          %152 = sbr.rel (%p150) target = $region20
        $region19: #{_seq2seq_forward.2} parent=11 // pred_region
          _
        $region20: #{_seq2seq_forward.2} parent=11 // pred_fallthru
          _
      $region12: #{_seq2seq_forward.2} parent=5 // pred_fallthru
        _
      %p153 = scmp.lt.s32.totalorder %s12, 8
      // Predicated region
      $region21: #{_seq2seq_forward.2} parent=5 // pred_check
        %p154 = pneg %p153
      $region22: #{_seq2seq_forward.2} parent=5 // pred_check_branch
        %156 = sbr.rel (%p154) target = $region24
      $region23: #{_seq2seq_forward.2} parent=5 // pred_region
        // Predicated region
        $region25: #{_seq2seq_forward.2} parent=23 // pred_check
          %p157 = pneg %p32
        $region26: #{_seq2seq_forward.2} parent=23 // pred_check_branch
          %159 = sbr.rel (%p157) target = $region28
        $region27: #{_seq2seq_forward.2} parent=23 // pred_region
          %p160 = scmp.lt.s32.totalorder %s12, 7
          %s161 = scalar_select %p160, %s12, 7
          %s162 = smul.addr %s161, 8
          %s163 = scalar_lea.vmem %s0, %s162
        $region28: #{_seq2seq_forward.2} parent=23 // pred_fallthru
          _
      $region24: #{_seq2seq_forward.2} parent=5 // pred_fallthru
        _
      %p164 = scmp.le.s32.totalorder 1, %s12
      %p165 = scmp.lt.s32.totalorder %s12, 9
      %p166 = pnand %p164, %p165
      %p167 = pneg %p166
      // Predicated region
      $region29: #{_seq2seq_forward.2} parent=5 // pred_check
        _
      $region30: #{_seq2seq_forward.2} parent=5 // pred_check_branch
        %169 = sbr.rel (%p166) target = $region32
      $region31: #{_seq2seq_forward.2} parent=5 // pred_region
        %s170 = ssub.s32 %s12, 1
        // Predicated region
        $region33: #{_seq2seq_forward.2} parent=31 // pred_check
          %p171 = pneg %p59
        $region34: #{_seq2seq_forward.2} parent=31 // pred_check_branch
          %173 = sbr.rel (%p171) target = $region36
        $region35: #{_seq2seq_forward.2} parent=31 // pred_region
          %174 = dma.done [#allocation6], 16384
        $region36: #{_seq2seq_forward.2} parent=31 // pred_fallthru
          _
        %p175 = scmp.lt.s32.totalorder %s17, 7
        %s176 = scalar_select %p175, %s17, 7
        %s177 = smul.addr %s176, 8
        %s178 = scalar_lea.vmem %s0, %s177
        %p179 = pneg %p38
        %p180 = pneg %p35
        %p181 = pneg %p59
        %p182 = pneg %p56
        %p183 = pneg %p80
        %p184 = pneg %p77
        %p185 = pneg %p101
        %p186 = pneg %p98
        %p187 = pneg %p122
        %p188 = pneg %p119
        %p189 = scmp.lt.s32.totalorder %s17, 7
        %s190 = scalar_select %p189, %s17, 7
        %s191 = smul.addr %s190, 8
        %s192 = scalar_lea.vmem %s0, %s191
        %p193 = scmp.eq.s32.totalorder %s17, 0
        // Predicated region
        $region37: #{_seq2seq_forward.2} parent=31 // pred_check
          %p194 = pneg %p193
        $region38: #{_seq2seq_forward.2} parent=31 // pred_check_branch
          %196 = sbr.rel (%p194) target = $region40
        $region39: #{_seq2seq_forward.2} parent=31 // pred_region
          %197 = vst [vmem:[#allocation3] sm:$0xff] 0.0
          %198 = vst [vmem:[#allocation4] sm:$0xff] 0.0
        $region40: #{_seq2seq_forward.2} parent=31 // pred_fallthru
          _
        %v199 = vld [vmem:[%s192] sm:$0xff]
        %200 = vst [vmem:[#allocation2] sm:$0xff] %v199
        %v201 = vld [vmem:[#allocation3] sm:$0xff]
        %202 = vst [vmem:[#allocation2 + $0x8] sm:$0xff] %v201
        %v203 = vld [vmem:[#allocation2] sm:$0xff]
        %v204 = vld [vmem:[#allocation2 + $0x8] sm:$0xff]
        %v205 = vld [vmem:[#allocation4] sm:$0xff]
        %v206 = vld [vmem:[#allocation5] sm:$0xff]
        %v207 = vld [vmem:[#allocation5 + $0x8] sm:$0xff]
        %v208 = vld [vmem:[#allocation5 + $0x10] sm:$0xff]
        %v209 = vld [vmem:[#allocation5 + $0x18] sm:$0xff]
        %v210 = vld [vmem:[#allocation5 + $0x20] sm:$0xff]
        %v211 = vld [vmem:[#allocation5 + $0x28] sm:$0xff]
        %v212 = vld [vmem:[#allocation5 + $0x30] sm:$0xff]
        %v213 = vld [vmem:[#allocation5 + $0x38] sm:$0xff]
        %v214 = vld [vmem:[#allocation5 + $0x40] sm:$0xff]
        %v215 = vld [vmem:[#allocation5 + $0x48] sm:$0xff]
        %v216 = vld [vmem:[#allocation5 + $0x50] sm:$0xff]
        %v217 = vld [vmem:[#allocation5 + $0x58] sm:$0xff]
        %v218 = vld [vmem:[#allocation5 + $0x60] sm:$0xff]
        %v219 = vld [vmem:[#allocation5 + $0x68] sm:$0xff]
        %v220 = vld [vmem:[#allocation5 + $0x70] sm:$0xff]
        %v221 = vld [vmem:[#allocation5 + $0x78] sm:$0xff]
        %v222 = vld [vmem:[#allocation5 + $0x80] sm:$0xff]
        %v223 = vld [vmem:[#allocation5 + $0x88] sm:$0xff]
        %v224 = vld [vmem:[#allocation5 + $0x90] sm:$0xff]
        %v225 = vld [vmem:[#allocation5 + $0x98] sm:$0xff]
        %v226 = vld [vmem:[#allocation5 + $0xa0] sm:$0xff]
        %v227 = vld [vmem:[#allocation5 + $0xa8] sm:$0xff]
        %v228 = vld [vmem:[#allocation5 + $0xb0] sm:$0xff]
        %v229 = vld [vmem:[#allocation5 + $0xb8] sm:$0xff]
        %v230 = vld [vmem:[#allocation5 + $0xc0] sm:$0xff]
        %v231 = vld [vmem:[#allocation5 + $0xc8] sm:$0xff]
        %v232 = vld [vmem:[#allocation5 + $0xd0] sm:$0xff]
        %v233 = vld [vmem:[#allocation5 + $0xd8] sm:$0xff]
        %v234 = vld [vmem:[#allocation5 + $0xe0] sm:$0xff]
        %v235 = vld [vmem:[#allocation5 + $0xe8] sm:$0xff]
        %v236 = vld [vmem:[#allocation5 + $0xf0] sm:$0xff]
        %v237 = vld [vmem:[#allocation5 + $0xf8] sm:$0xff]
        %v238 = vld [vmem:[#allocation5 + $0x100] sm:$0xff]
        %v239 = vld [vmem:[#allocation5 + $0x108] sm:$0xff]
        %v240 = vld [vmem:[#allocation5 + $0x110] sm:$0xff]
        %v241 = vld [vmem:[#allocation5 + $0x118] sm:$0xff]
        %v242 = vld [vmem:[#allocation5 + $0x120] sm:$0xff]
        %v243 = vld [vmem:[#allocation5 + $0x128] sm:$0xff]
        %v244 = vld [vmem:[#allocation5 + $0x130] sm:$0xff]
        %v245 = vld [vmem:[#allocation5 + $0x138] sm:$0xff]
        %v246 = vld [vmem:[#allocation5 + $0x140] sm:$0xff]
        %v247 = vld [vmem:[#allocation5 + $0x148] sm:$0xff]
        %v248 = vld [vmem:[#allocation5 + $0x150] sm:$0xff]
        %v249 = vld [vmem:[#allocation5 + $0x158] sm:$0xff]
        %v250 = vld [vmem:[#allocation5 + $0x160] sm:$0xff]
        %v251 = vld [vmem:[#allocation5 + $0x168] sm:$0xff]
        %v252 = vld [vmem:[#allocation5 + $0x170] sm:$0xff]
        %v253 = vld [vmem:[#allocation5 + $0x178] sm:$0xff]
        %v254 = vld [vmem:[#allocation5 + $0x180] sm:$0xff]
        %v255 = vld [vmem:[#allocation5 + $0x188] sm:$0xff]
        %v256 = vld [vmem:[#allocation5 + $0x190] sm:$0xff]
        %v257 = vld [vmem:[#allocation5 + $0x198] sm:$0xff]
        %v258 = vld [vmem:[#allocation5 + $0x1a0] sm:$0xff]
        %v259 = vld [vmem:[#allocation5 + $0x1a8] sm:$0xff]
        %v260 = vld [vmem:[#allocation5 + $0x1b0] sm:$0xff]
        %v261 = vld [vmem:[#allocation5 + $0x1b8] sm:$0xff]
        %v262 = vld [vmem:[#allocation5 + $0x1c0] sm:$0xff]
        %v263 = vld [vmem:[#allocation5 + $0x1c8] sm:$0xff]
        %v264 = vld [vmem:[#allocation5 + $0x1d0] sm:$0xff]
        %v265 = vld [vmem:[#allocation5 + $0x1d8] sm:$0xff]
        %v266 = vld [vmem:[#allocation5 + $0x1e0] sm:$0xff]
        %v267 = vld [vmem:[#allocation5 + $0x1e8] sm:$0xff]
        %v268 = vld [vmem:[#allocation5 + $0x1f0] sm:$0xff]
        %v269 = vld [vmem:[#allocation5 + $0x1f8] sm:$0xff]
        %v270 = vld [vmem:[#allocation5 + $0x200] sm:$0xff]
        %v271 = vld [vmem:[#allocation5 + $0x208] sm:$0xff]
        %v272 = vld [vmem:[#allocation5 + $0x210] sm:$0xff]
        %v273 = vld [vmem:[#allocation5 + $0x218] sm:$0xff]
        %v274 = vld [vmem:[#allocation5 + $0x220] sm:$0xff]
        %v275 = vld [vmem:[#allocation5 + $0x228] sm:$0xff]
        %v276 = vld [vmem:[#allocation5 + $0x230] sm:$0xff]
        %v277 = vld [vmem:[#allocation5 + $0x238] sm:$0xff]
        %v278 = vld [vmem:[#allocation5 + $0x240] sm:$0xff]
        %v279 = vld [vmem:[#allocation5 + $0x248] sm:$0xff]
        %v280 = vld [vmem:[#allocation5 + $0x250] sm:$0xff]
        %v281 = vld [vmem:[#allocation5 + $0x258] sm:$0xff]
        %v282 = vld [vmem:[#allocation5 + $0x260] sm:$0xff]
        %v283 = vld [vmem:[#allocation5 + $0x268] sm:$0xff]
        %v284 = vld [vmem:[#allocation5 + $0x270] sm:$0xff]
        %v285 = vld [vmem:[#allocation5 + $0x278] sm:$0xff]
        %v286 = vld [vmem:[#allocation5 + $0x280] sm:$0xff]
        %v287 = vld [vmem:[#allocation5 + $0x288] sm:$0xff]
        %v288 = vld [vmem:[#allocation5 + $0x290] sm:$0xff]
        %v289 = vld [vmem:[#allocation5 + $0x298] sm:$0xff]
        %v290 = vld [vmem:[#allocation5 + $0x2a0] sm:$0xff]
        %v291 = vld [vmem:[#allocation5 + $0x2a8] sm:$0xff]
        %v292 = vld [vmem:[#allocation5 + $0x2b0] sm:$0xff]
        %v293 = vld [vmem:[#allocation5 + $0x2b8] sm:$0xff]
        %v294 = vld [vmem:[#allocation5 + $0x2c0] sm:$0xff]
        %v295 = vld [vmem:[#allocation5 + $0x2c8] sm:$0xff]
        %v296 = vld [vmem:[#allocation5 + $0x2d0] sm:$0xff]
        %v297 = vld [vmem:[#allocation5 + $0x2d8] sm:$0xff]
        %v298 = vld [vmem:[#allocation5 + $0x2e0] sm:$0xff]
        %v299 = vld [vmem:[#allocation5 + $0x2e8] sm:$0xff]
        %v300 = vld [vmem:[#allocation5 + $0x2f0] sm:$0xff]
        %v301 = vld [vmem:[#allocation5 + $0x2f8] sm:$0xff]
        %v302 = vld [vmem:[#allocation5 + $0x300] sm:$0xff]
        %v303 = vld [vmem:[#allocation5 + $0x308] sm:$0xff]
        %v304 = vld [vmem:[#allocation5 + $0x310] sm:$0xff]
        %v305 = vld [vmem:[#allocation5 + $0x318] sm:$0xff]
        %v306 = vld [vmem:[#allocation5 + $0x320] sm:$0xff]
        %v307 = vld [vmem:[#allocation5 + $0x328] sm:$0xff]
        %v308 = vld [vmem:[#allocation5 + $0x330] sm:$0xff]
        %v309 = vld [vmem:[#allocation5 + $0x338] sm:$0xff]
        %v310 = vld [vmem:[#allocation5 + $0x340] sm:$0xff]
        %v311 = vld [vmem:[#allocation5 + $0x348] sm:$0xff]
        %v312 = vld [vmem:[#allocation5 + $0x350] sm:$0xff]
        %v313 = vld [vmem:[#allocation5 + $0x358] sm:$0xff]
        %v314 = vld [vmem:[#allocation5 + $0x360] sm:$0xff]
        %v315 = vld [vmem:[#allocation5 + $0x368] sm:$0xff]
        %v316 = vld [vmem:[#allocation5 + $0x370] sm:$0xff]
        %v317 = vld [vmem:[#allocation5 + $0x378] sm:$0xff]
        %v318 = vld [vmem:[#allocation5 + $0x380] sm:$0xff]
        %v319 = vld [vmem:[#allocation5 + $0x388] sm:$0xff]
        %v320 = vld [vmem:[#allocation5 + $0x390] sm:$0xff]
        %v321 = vld [vmem:[#allocation5 + $0x398] sm:$0xff]
        %v322 = vld [vmem:[#allocation5 + $0x3a0] sm:$0xff]
        %v323 = vld [vmem:[#allocation5 + $0x3a8] sm:$0xff]
        %v324 = vld [vmem:[#allocation5 + $0x3b0] sm:$0xff]
        %v325 = vld [vmem:[#allocation5 + $0x3b8] sm:$0xff]
        %v326 = vld [vmem:[#allocation5 + $0x3c0] sm:$0xff]
        %v327 = vld [vmem:[#allocation5 + $0x3c8] sm:$0xff]
        %v328 = vld [vmem:[#allocation5 + $0x3d0] sm:$0xff]
        %v329 = vld [vmem:[#allocation5 + $0x3d8] sm:$0xff]
        %v330 = vld [vmem:[#allocation5 + $0x3e0] sm:$0xff]
        %v331 = vld [vmem:[#allocation5 + $0x3e8] sm:$0xff]
        %v332 = vld [vmem:[#allocation5 + $0x3f0] sm:$0xff]
        %v333 = vld [vmem:[#allocation5 + $0x3f8] sm:$0xff]
        %v334 = vld [vmem:[%s2] sm:$0xf]
        %v336 = vlaneseq
        %v337 = vshrl.u32 %v336, 7
        %v338 = vsub.s32 0, %v337
        %v339 = vrot.slane %v334, %v338
        %v340 = vlaneseq
        %v341 = vshrl.u32 %v340, 7
        %v342 = vsub.s32 1, %v341
        %v343 = vrot.slane %v334, %v342
        %v344 = vlaneseq
        %v345 = vshrl.u32 %v344, 7
        %v346 = vsub.s32 2, %v345
        %v347 = vrot.slane %v334, %v346
        %v348 = vlaneseq
        %v349 = vshrl.u32 %v348, 7
        %v350 = vsub.s32 3, %v349
        %v351 = vrot.slane %v334, %v350
        %356 = vmatprep.subr.mxu0 %v207
        %357 = vmatpush1.msra.mxu0 %v206
        %358 = vmatprep.subr.mxu0 %v211
        %359 = vmatpush1.msra.mxu0 %v210
        %360 = vmatprep.subr.mxu0 %v215
        %361 = vmatpush1.msra.mxu0 %v214
        %362 = vmatprep.subr.mxu0 %v219
        %363 = vmatpush1.msra.mxu0 %v218
        %364 = vmatprep.subr.mxu0 %v223
        %365 = vmatpush1.msra.mxu0 %v222
        %366 = vmatprep.subr.mxu0 %v227
        %367 = vmatpush1.msra.mxu0 %v226
        %368 = vmatprep.subr.mxu0 %v231
        %369 = vmatpush1.msra.mxu0 %v230
        %370 = vmatprep.subr.mxu0 %v235
        %371 = vmatpush1.msra.mxu0 %v234
        %372 = vmatprep.subr.mxu0 %v239
        %373 = vmatpush1.msra.mxu0 %v238
        %374 = vmatprep.subr.mxu0 %v243
        %375 = vmatpush1.msra.mxu0 %v242
        %376 = vmatprep.subr.mxu0 %v247
        %377 = vmatpush1.msra.mxu0 %v246
        %378 = vmatprep.subr.mxu0 %v251
        %379 = vmatpush1.msra.mxu0 %v250
        %380 = vmatprep.subr.mxu0 %v255
        %381 = vmatpush1.msra.mxu0 %v254
        %382 = vmatprep.subr.mxu0 %v259
        %383 = vmatpush1.msra.mxu0 %v258
        %384 = vmatprep.subr.mxu0 %v263
        %385 = vmatpush1.msra.mxu0 %v262
        %386 = vmatprep.subr.mxu0 %v267
        %387 = vmatpush1.msra.mxu0 %v266
        %388 = vmatprep.subr.mxu0 %v271
        %389 = vmatpush1.msra.mxu0 %v270
        %390 = vmatprep.subr.mxu0 %v275
        %391 = vmatpush1.msra.mxu0 %v274
        %392 = vmatprep.subr.mxu0 %v279
        %393 = vmatpush1.msra.mxu0 %v278
        %394 = vmatprep.subr.mxu0 %v283
        %395 = vmatpush1.msra.mxu0 %v282
        %396 = vmatprep.subr.mxu0 %v287
        %397 = vmatpush1.msra.mxu0 %v286
        %398 = vmatprep.subr.mxu0 %v291
        %399 = vmatpush1.msra.mxu0 %v290
        %400 = vmatprep.subr.mxu0 %v295
        %401 = vmatpush1.msra.mxu0 %v294
        %402 = vmatprep.subr.mxu0 %v299
        %403 = vmatpush1.msra.mxu0 %v298
        %404 = vmatprep.subr.mxu0 %v303
        %405 = vmatpush1.msra.mxu0 %v302
        %406 = vmatprep.subr.mxu0 %v307
        %407 = vmatpush1.msra.mxu0 %v306
        %408 = vmatprep.subr.mxu0 %v311
        %409 = vmatpush1.msra.mxu0 %v310
        %410 = vmatprep.subr.mxu0 %v315
        %411 = vmatpush1.msra.mxu0 %v314
        %412 = vmatprep.subr.mxu0 %v319
        %413 = vmatpush1.msra.mxu0 %v318
        %414 = vmatprep.subr.mxu0 %v323
        %415 = vmatpush1.msra.mxu0 %v322
        %416 = vmatprep.subr.mxu0 %v327
        %417 = vmatpush1.msra.mxu0 %v326
        %418 = vmatprep.subr.mxu0 %v331
        %419 = vmatpush1.msra.mxu0 %v330
        %420 = vmatprep.mubr.f32.mxu0 %v204
        %421 = vmatmul.mubr.f32.gmra.mrb[0].mxu0 %v203
        %v422 = vpop.f32.mrb[0].mxu0
        %v423 = vadd.f32 %v339, %v422
        %v424 = vpop.f32.mrb[0].mxu0
        %v425 = vadd.f32 %v343, %v424
        %426 = vdwg.mxu0
        %427 = vmatprep.subr.mxu0 %v209
        %428 = vmatpush1.msra.mxu0 %v208
        %429 = vmatprep.subr.mxu0 %v213
        %430 = vmatpush1.msra.mxu0 %v212
        %431 = vmatprep.subr.mxu0 %v217
        %432 = vmatpush1.msra.mxu0 %v216
        %433 = vmatprep.subr.mxu0 %v221
        %434 = vmatpush1.msra.mxu0 %v220
        %435 = vmatprep.subr.mxu0 %v225
        %436 = vmatpush1.msra.mxu0 %v224
        %437 = vmatprep.subr.mxu0 %v229
        %438 = vmatpush1.msra.mxu0 %v228
        %439 = vmatprep.subr.mxu0 %v233
        %440 = vmatpush1.msra.mxu0 %v232
        %441 = vmatprep.subr.mxu0 %v237
        %442 = vmatpush1.msra.mxu0 %v236
        %443 = vmatprep.subr.mxu0 %v241
        %444 = vmatpush1.msra.mxu0 %v240
        %445 = vmatprep.subr.mxu0 %v245
        %446 = vmatpush1.msra.mxu0 %v244
        %447 = vmatprep.subr.mxu0 %v249
        %448 = vmatpush1.msra.mxu0 %v248
        %449 = vmatprep.subr.mxu0 %v253
        %450 = vmatpush1.msra.mxu0 %v252
        %451 = vmatprep.subr.mxu0 %v257
        %452 = vmatpush1.msra.mxu0 %v256
        %453 = vmatprep.subr.mxu0 %v261
        %454 = vmatpush1.msra.mxu0 %v260
        %455 = vmatprep.subr.mxu0 %v265
        %456 = vmatpush1.msra.mxu0 %v264
        %457 = vmatprep.subr.mxu0 %v269
        %458 = vmatpush1.msra.mxu0 %v268
        %459 = vmatprep.subr.mxu0 %v273
        %460 = vmatpush1.msra.mxu0 %v272
        %461 = vmatprep.subr.mxu0 %v277
        %462 = vmatpush1.msra.mxu0 %v276
        %463 = vmatprep.subr.mxu0 %v281
        %464 = vmatpush1.msra.mxu0 %v280
        %465 = vmatprep.subr.mxu0 %v285
        %466 = vmatpush1.msra.mxu0 %v284
        %467 = vmatprep.subr.mxu0 %v289
        %468 = vmatpush1.msra.mxu0 %v288
        %469 = vmatprep.subr.mxu0 %v293
        %470 = vmatpush1.msra.mxu0 %v292
        %471 = vmatprep.subr.mxu0 %v297
        %472 = vmatpush1.msra.mxu0 %v296
        %473 = vmatprep.subr.mxu0 %v301
        %474 = vmatpush1.msra.mxu0 %v300
        %475 = vmatprep.subr.mxu0 %v305
        %476 = vmatpush1.msra.mxu0 %v304
        %477 = vmatprep.subr.mxu0 %v309
        %478 = vmatpush1.msra.mxu0 %v308
        %479 = vmatprep.subr.mxu0 %v313
        %480 = vmatpush1.msra.mxu0 %v312
        %481 = vmatprep.subr.mxu0 %v317
        %482 = vmatpush1.msra.mxu0 %v316
        %483 = vmatprep.subr.mxu0 %v321
        %484 = vmatpush1.msra.mxu0 %v320
        %485 = vmatprep.subr.mxu0 %v325
        %486 = vmatpush1.msra.mxu0 %v324
        %487 = vmatprep.subr.mxu0 %v329
        %488 = vmatpush1.msra.mxu0 %v328
        %489 = vmatprep.subr.mxu0 %v333
        %490 = vmatpush1.msra.mxu0 %v332
        %491 = vmatprep.mubr.f32.mxu0 %v204
        %492 = vmatmul.mubr.f32.gmra.mrb[0].mxu0 %v203
        %v493 = vpop.f32.mrb[0].mxu0
        %v494 = vadd.f32 %v347, %v493
        %v495 = vpop.f32.mrb[0].mxu0
        %v496 = vadd.f32 %v351, %v495
        %497 = vdwg.mxu0
        %v498 = vxor.u32 %v423, 2147483648
        %v499 = vmul.f32 %v498, 1.442695
        %v500 = vpow.pop %v499
        %v501 = vadd.f32 %v500, 1.0
        %v502 = vrcp.pop %v501
        %v503 = vmul.f32 1.0, %v502
        %v504 = vxor.u32 %v425, 2147483648
        %v505 = vmul.f32 %v504, 1.442695
        %v506 = vpow.pop %v505
        %v507 = vadd.f32 %v506, 1.0
        %v508 = vrcp.pop %v507
        %v509 = vmul.f32 1.0, %v508
        %v510 = vtanh.pop %v494
        %v511 = vxor.u32 %v496, 2147483648
        %v512 = vmul.f32 %v511, 1.442695
        %v513 = vpow.pop %v512
        %v514 = vadd.f32 %v513, 1.0
        %v515 = vrcp.pop %v514
        %v516 = vmul.f32 1.0, %v515
        %v517 = vmul.f32 %v509, %v205
        %v518 = vmul.f32 %v503, %v510
        %v519 = vadd.f32 %v517, %v518
        %v520 = vtanh.pop %v519
        %v521 = vmul.f32 %v516, %v520
        %522 = vst [vmem:[#allocation3] sm:$0xff] %v521
        %523 = vst [vmem:[#allocation4] sm:$0xff] %v519
        %p524 = scmp.eq.s32.totalorder %s17, 7
        // Predicated region
        $region41: #{_seq2seq_forward.2} parent=31 // pred_check
          %p525 = pneg %p524
        $region42: #{_seq2seq_forward.2} parent=31 // pred_check_branch
          %527 = sbr.rel (%p525) target = $region44
        $region43: #{_seq2seq_forward.2} parent=31 // pred_region
          %528 = vst [vmem:[%s3] sm:$0xff] %v521
          %529 = vst [vmem:[%s4] sm:$0xff] %v519
        $region44: #{_seq2seq_forward.2} parent=31 // pred_fallthru
          _
        // Predicated region
        $region45: #{_seq2seq_forward.2} parent=31 // pred_check
          %p530 = pneg %p98
        $region46: #{_seq2seq_forward.2} parent=31 // pred_check_branch
          %532 = sbr.rel (%p530) target = $region48
        $region47: #{_seq2seq_forward.2} parent=31 // pred_region
          _
        $region48: #{_seq2seq_forward.2} parent=31 // pred_fallthru
          _
        // Predicated region
        $region49: #{_seq2seq_forward.2} parent=31 // pred_check
          %p533 = pneg %p119
        $region50: #{_seq2seq_forward.2} parent=31 // pred_check_branch
          %535 = sbr.rel (%p533) target = $region52
        $region51: #{_seq2seq_forward.2} parent=31 // pred_region
          _
        $region52: #{_seq2seq_forward.2} parent=31 // pred_fallthru
          _
        // Predicated region
        $region53: #{_seq2seq_forward.2} parent=31 // pred_check
          %p536 = pneg %p98
        $region54: #{_seq2seq_forward.2} parent=31 // pred_check_branch
          %538 = sbr.rel (%p536) target = $region56
        $region55: #{_seq2seq_forward.2} parent=31 // pred_region
          _
        $region56: #{_seq2seq_forward.2} parent=31 // pred_fallthru
          _
        // Predicated region
        $region57: #{_seq2seq_forward.2} parent=31 // pred_check
          %p539 = pneg %p119
        $region58: #{_seq2seq_forward.2} parent=31 // pred_check_branch
          %541 = sbr.rel (%p539) target = $region60
        $region59: #{_seq2seq_forward.2} parent=31 // pred_region
          _
        $region60: #{_seq2seq_forward.2} parent=31 // pred_fallthru
          _
      $region32: #{_seq2seq_forward.2} parent=5 // pred_fallthru
        _
      %p542 = scmp.le.s32.totalorder 2, %s12
      // Predicated region
      $region61: #{_seq2seq_forward.2} parent=5 // pred_check
        %p543 = pneg %p542
      $region62: #{_seq2seq_forward.2} parent=5 // pred_check_branch
        %545 = sbr.rel (%p543) target = $region64
      $region63: #{_seq2seq_forward.2} parent=5 // pred_region
        %s546 = ssub.s32 %s12, 2
      $region64: #{_seq2seq_forward.2} parent=5 // pred_fallthru
        _
    $region6: #{_seq2seq_forward.2} parent=1 // loop_footer
      %s16 = sadd.s32 1, %s12
    $region7: #{_seq2seq_forward.2} parent=1 // loop_footer_branch
      %11 = sbr.rel target = $region3
    $region8: #{_seq2seq_forward.2} parent=1 // loop_exit
      _
    %547 = vsyncpa [#allocation6], 1
    %s548 = scalar_lea.sflag [#allocation6], 1
    %549 = vsyncpa %s548, 1

// kernel: _seq2seq_forward.3
$region0: #{_seq2seq_forward.3}
  #allocation0 [shape = 'u32[]', space=smem, size = 0x4, offset = 0x4, fixed_abs, tag = 'smem constant byte address 0x4 - core index']
  #allocation1 [shape = 'u32[144,128]{1,0:T(1,128)}', space=vmem, size = 0x12000, scoped, tag = 'internal scratch']
  #allocation2 [shape = 'f32[8,256]{1,0:T(8,128)}', space=vmem, size = 0x2000, scoped, tag = 'scratch operand']
  #allocation3 [shape = 'f32[8,128]{1,0:T(8,128)}', space=vmem, size = 0x1000, scoped, tag = 'scratch operand']
  #allocation4 [shape = 'f32[8,128]{1,0:T(8,128)}', space=vmem, size = 0x1000, scoped, tag = 'scratch operand']
  #allocation5 [shape = 'f32[8,128]{1,0:T(8,128)}', space=vmem, size = 0x1000, scoped, tag = 'scratch operand']
  #allocation6 [shape = 's32[1]{0}', space=sflag, size = 0x4, scoped, tag = 'scoped memory for _seq2seq_forward.3']
  #allocation7 [shape = 'u8[512]{0}', space=smem, size = 0x200, scoped, tag = 'prefetched SMEM operand 0']
  %s0 = inlined_call_operand.vmem [shape: s32[7], index: 0, kind: input, shape index: {}]
  %s1 = inlined_call_operand.vmem [shape: f32[8,8,128], index: 1, kind: input, shape index: {}]
  %s2 = inlined_call_operand.vmem [shape: f32[8,128], index: 2, kind: input, shape index: {}]
  %s3 = inlined_call_operand.vmem [shape: f32[8,128], index: 3, kind: input, shape index: {}]
  %s4 = inlined_call_operand.vmem [shape: f32[128,128], index: 4, kind: input, shape index: {}]
  %s5 = inlined_call_operand.vmem [shape: f32[256,512], index: 5, kind: input, shape index: {}]
  %s6 = inlined_call_operand.vmem [shape: f32[1,512], index: 6, kind: input, shape index: {}]
  %s7 = inlined_call_operand.vmem [shape: f32[128,128], index: 7, kind: input, shape index: {}]
  %s8 = inlined_call_operand.vmem [shape: f32[1,128], index: 8, kind: input, shape index: {}]
  %s9 = inlined_call_operand.vmem [shape: f32[7,8,128], index: 9, kind: output, shape index: {}]
  %s10 = sld [smem:[#allocation0]]
  $region69: #{_seq2seq_forward.3} parent=0
    _
  %s12 = ssub.s32 1, %s10
  %s13 = scalar_select 0, %s12, %s10
  %s14 = sshll.u32 %s0, 4
  %s15 = int_to_ptr.vmem [resolvable:$true] %s14
  %17 = dma.vmem_to_smem %s15, 16, [#allocation7], [#allocation6]
  %18 = dma.done [#allocation6], 16
  %19 = sfence
  loop: start=0, step=1, limit=9
  $region2: #{_seq2seq_forward.3} parent=0 // loop_pre_header
    _
  $region3: #{_seq2seq_forward.3} parent=0 // loop_header
    %s21 = sphi 0, %s25
    %p22 = scmp.ge.s32.totalorder %s21, 9
    %s29 = sphi 0, %s29
    %s31 = sphi 0, %s29
    %s32 = sphi 0, %s31
    %s46 = sphi 0, %s32
    %s50 = sphi 0, %s50
    %s52 = sphi 0, %s50
    %s53 = sphi 0, %s52
    %s67 = sphi 0, %s53
    %s71 = sphi 0, %s71
    %s73 = sphi 0, %s71
    %s74 = sphi 0, %s73
    %s88 = sphi 0, %s74
    %s92 = sphi 0, %s92
    %s94 = sphi 0, %s92
    %s95 = sphi 0, %s94
    %s109 = sphi 0, %s95
    %s113 = sphi 0, %s113
    %s115 = sphi 0, %s113
    %s116 = sphi 0, %s115
    %s130 = sphi 0, %s116
    %s134 = sphi 0, %s134
    %s136 = sphi 0, %s134
    %s137 = sphi 0, %s136
    %s151 = sphi 0, %s137
    %s155 = sphi 0, %s155
    %s157 = sphi 0, %s155
    %s158 = sphi 0, %s157
    %s172 = sphi 0, %s158
    %s176 = sphi 0, %s176
    %s178 = sphi 0, %s176
    %s179 = sphi 0, %s178
    %s193 = sphi 0, %s179
    %s199 = sphi 0, %s201
    %s202 = sphi 0, %s199
    %s203 = sphi 0, %s202
    %s219 = sphi 0, %s203
  $region4: #{_seq2seq_forward.3} parent=0 // loop_header_branch
    %24 = sbr.rel (%p22) target = $region8
  $region5: #{_seq2seq_forward.3} parent=0 // loop_body
    %s26 = ssub.s32 %s21, 1
    %s27 = ssub.s32 %s21, 2
    %s28 = sadd.s32 %s21, 1
    %s30 = sadd.s32 %s29, 1
    %p33 = scmp.eq.s32.totalorder %s21, 6
    %p34 = scmp.ne.s32.totalorder %s29, %s31
    %p35 = scmp.eq.s32.totalorder %s21, 0
    %p36 = por %p34, %p35
    %p37 = scmp.ne.s32.totalorder %s29, %s31
    %p38 = scmp.eq.s32.totalorder %s26, 6
    %p39 = por %p37, %p38
    %p40 = scmp.ne.s32.totalorder %s31, %s32
    %p41 = scmp.eq.s32.totalorder %s26, 0
    %p42 = por %p40, %p41
    %p43 = scmp.ne.s32.totalorder %s31, %s32
    %p44 = scmp.eq.s32.totalorder %s27, 6
    %p45 = por %p43, %p44
    %p47 = scmp.ne.s32.totalorder %s32, %s46
    %p48 = scmp.eq.s32.totalorder %s27, 0
    %p49 = por %p47, %p48
    %s51 = sadd.s32 %s50, 1
    %p54 = scmp.eq.s32.totalorder %s21, 6
    %p55 = scmp.ne.s32.totalorder %s50, %s52
    %p56 = scmp.eq.s32.totalorder %s21, 0
    %p57 = por %p55, %p56
    %p58 = scmp.ne.s32.totalorder %s50, %s52
    %p59 = scmp.eq.s32.totalorder %s26, 6
    %p60 = por %p58, %p59
    %p61 = scmp.ne.s32.totalorder %s52, %s53
    %p62 = scmp.eq.s32.totalorder %s26, 0
    %p63 = por %p61, %p62
    %p64 = scmp.ne.s32.totalorder %s52, %s53
    %p65 = scmp.eq.s32.totalorder %s27, 6
    %p66 = por %p64, %p65
    %p68 = scmp.ne.s32.totalorder %s53, %s67
    %p69 = scmp.eq.s32.totalorder %s27, 0
    %p70 = por %p68, %p69
    %s72 = sadd.s32 %s71, 1
    %p75 = scmp.eq.s32.totalorder %s21, 6
    %p76 = scmp.ne.s32.totalorder %s71, %s73
    %p77 = scmp.eq.s32.totalorder %s21, 0
    %p78 = por %p76, %p77
    %p79 = scmp.ne.s32.totalorder %s71, %s73
    %p80 = scmp.eq.s32.totalorder %s26, 6
    %p81 = por %p79, %p80
    %p82 = scmp.ne.s32.totalorder %s73, %s74
    %p83 = scmp.eq.s32.totalorder %s26, 0
    %p84 = por %p82, %p83
    %p85 = scmp.ne.s32.totalorder %s73, %s74
    %p86 = scmp.eq.s32.totalorder %s27, 6
    %p87 = por %p85, %p86
    %p89 = scmp.ne.s32.totalorder %s74, %s88
    %p90 = scmp.eq.s32.totalorder %s27, 0
    %p91 = por %p89, %p90
    %s93 = sadd.s32 %s92, 1
    %p96 = scmp.eq.s32.totalorder %s21, 6
    %p97 = scmp.ne.s32.totalorder %s92, %s94
    %p98 = scmp.eq.s32.totalorder %s21, 0
    %p99 = por %p97, %p98
    %p100 = scmp.ne.s32.totalorder %s92, %s94
    %p101 = scmp.eq.s32.totalorder %s26, 6
    %p102 = por %p100, %p101
    %p103 = scmp.ne.s32.totalorder %s94, %s95
    %p104 = scmp.eq.s32.totalorder %s26, 0
    %p105 = por %p103, %p104
    %p106 = scmp.ne.s32.totalorder %s94, %s95
    %p107 = scmp.eq.s32.totalorder %s27, 6
    %p108 = por %p106, %p107
    %p110 = scmp.ne.s32.totalorder %s95, %s109
    %p111 = scmp.eq.s32.totalorder %s27, 0
    %p112 = por %p110, %p111
    %s114 = sadd.s32 %s113, 1
    %p117 = scmp.eq.s32.totalorder %s21, 6
    %p118 = scmp.ne.s32.totalorder %s113, %s115
    %p119 = scmp.eq.s32.totalorder %s21, 0
    %p120 = por %p118, %p119
    %p121 = scmp.ne.s32.totalorder %s113, %s115
    %p122 = scmp.eq.s32.totalorder %s26, 6
    %p123 = por %p121, %p122
    %p124 = scmp.ne.s32.totalorder %s115, %s116
    %p125 = scmp.eq.s32.totalorder %s26, 0
    %p126 = por %p124, %p125
    %p127 = scmp.ne.s32.totalorder %s115, %s116
    %p128 = scmp.eq.s32.totalorder %s27, 6
    %p129 = por %p127, %p128
    %p131 = scmp.ne.s32.totalorder %s116, %s130
    %p132 = scmp.eq.s32.totalorder %s27, 0
    %p133 = por %p131, %p132
    %s135 = sadd.s32 %s134, 1
    %p138 = scmp.eq.s32.totalorder %s21, 6
    %p139 = scmp.ne.s32.totalorder %s134, %s136
    %p140 = scmp.eq.s32.totalorder %s21, 0
    %p141 = por %p139, %p140
    %p142 = scmp.ne.s32.totalorder %s134, %s136
    %p143 = scmp.eq.s32.totalorder %s26, 6
    %p144 = por %p142, %p143
    %p145 = scmp.ne.s32.totalorder %s136, %s137
    %p146 = scmp.eq.s32.totalorder %s26, 0
    %p147 = por %p145, %p146
    %p148 = scmp.ne.s32.totalorder %s136, %s137
    %p149 = scmp.eq.s32.totalorder %s27, 6
    %p150 = por %p148, %p149
    %p152 = scmp.ne.s32.totalorder %s137, %s151
    %p153 = scmp.eq.s32.totalorder %s27, 0
    %p154 = por %p152, %p153
    %s156 = sadd.s32 %s155, 1
    %p159 = scmp.eq.s32.totalorder %s21, 6
    %p160 = scmp.ne.s32.totalorder %s155, %s157
    %p161 = scmp.eq.s32.totalorder %s21, 0
    %p162 = por %p160, %p161
    %p163 = scmp.ne.s32.totalorder %s155, %s157
    %p164 = scmp.eq.s32.totalorder %s26, 6
    %p165 = por %p163, %p164
    %p166 = scmp.ne.s32.totalorder %s157, %s158
    %p167 = scmp.eq.s32.totalorder %s26, 0
    %p168 = por %p166, %p167
    %p169 = scmp.ne.s32.totalorder %s157, %s158
    %p170 = scmp.eq.s32.totalorder %s27, 6
    %p171 = por %p169, %p170
    %p173 = scmp.ne.s32.totalorder %s158, %s172
    %p174 = scmp.eq.s32.totalorder %s27, 0
    %p175 = por %p173, %p174
    %s177 = sadd.s32 %s176, 1
    %p180 = scmp.eq.s32.totalorder %s21, 6
    %p181 = scmp.ne.s32.totalorder %s176, %s178
    %p182 = scmp.eq.s32.totalorder %s21, 0
    %p183 = por %p181, %p182
    %p184 = scmp.ne.s32.totalorder %s176, %s178
    %p185 = scmp.eq.s32.totalorder %s26, 6
    %p186 = por %p184, %p185
    %p187 = scmp.ne.s32.totalorder %s178, %s179
    %p188 = scmp.eq.s32.totalorder %s26, 0
    %p189 = por %p187, %p188
    %p190 = scmp.ne.s32.totalorder %s178, %s179
    %p191 = scmp.eq.s32.totalorder %s27, 6
    %p192 = por %p190, %p191
    %p194 = scmp.ne.s32.totalorder %s179, %s193
    %p195 = scmp.eq.s32.totalorder %s27, 0
    %p196 = por %p194, %p195
    %s197 = ssub.s32 %s21, %s28
    %p198 = scmp.eq.s32.totalorder %s197, 0
    %s200 = sadd.s32 %s199, 1
    %s201 = scalar_select %p198, %s199, %s200
    %p204 = pneg %p198
    %p205 = scmp.eq.s32.totalorder %s21, 6
    %p206 = por %p204, %p205
    %p207 = scmp.ne.s32.totalorder %s199, %s202
    %p208 = scmp.eq.s32.totalorder %s21, 0
    %p209 = por %p207, %p208
    %p210 = scmp.ne.s32.totalorder %s199, %s202
    %p211 = scmp.eq.s32.totalorder %s26, 6
    %p212 = por %p210, %p211
    %p213 = scmp.ne.s32.totalorder %s202, %s203
    %p214 = scmp.eq.s32.totalorder %s26, 0
    %p215 = por %p213, %p214
    %p216 = scmp.ne.s32.totalorder %s202, %s203
    %p217 = scmp.eq.s32.totalorder %s27, 6
    %p218 = por %p216, %p217
    %p220 = scmp.ne.s32.totalorder %s203, %s219
    %p221 = scmp.eq.s32.totalorder %s27, 0
    %p222 = por %p220, %p221
    %p223 = scmp.le.s32.totalorder 1, %s21
    %p224 = scmp.lt.s32.totalorder %s21, 8
    %p225 = pnand %p223, %p224
    %p226 = pneg %p225
    // Predicated region
    $region9: #{_seq2seq_forward.3} parent=5 // pred_check
      _
    $region10: #{_seq2seq_forward.3} parent=5 // pred_check_branch
      %228 = sbr.rel (%p225) target = $region12
    $region11: #{_seq2seq_forward.3} parent=5 // pred_region
      %s229 = ssub.s32 %s21, 1
      // Predicated region
      $region13: #{_seq2seq_forward.3} parent=11 // pred_check
        %p230 = pneg %p42
      $region14: #{_seq2seq_forward.3} parent=11 // pred_check_branch
        %232 = sbr.rel (%p230) target = $region16
      $region15: #{_seq2seq_forward.3} parent=11 // pred_region
        _
      $region16: #{_seq2seq_forward.3} parent=11 // pred_fallthru
        _
      // Predicated region
      $region17: #{_seq2seq_forward.3} parent=11 // pred_check
        %p233 = pneg %p63
      $region18: #{_seq2seq_forward.3} parent=11 // pred_check_branch
        %235 = sbr.rel (%p233) target = $region20
      $region19: #{_seq2seq_forward.3} parent=11 // pred_region
        _
      $region20: #{_seq2seq_forward.3} parent=11 // pred_fallthru
        _
      // Predicated region
      $region21: #{_seq2seq_forward.3} parent=11 // pred_check
        %p236 = pneg %p84
      $region22: #{_seq2seq_forward.3} parent=11 // pred_check_branch
        %238 = sbr.rel (%p236) target = $region24
      $region23: #{_seq2seq_forward.3} parent=11 // pred_region
        _
      $region24: #{_seq2seq_forward.3} parent=11 // pred_fallthru
        _
      // Predicated region
      $region25: #{_seq2seq_forward.3} parent=11 // pred_check
        %p239 = pneg %p105
      $region26: #{_seq2seq_forward.3} parent=11 // pred_check_branch
        %241 = sbr.rel (%p239) target = $region28
      $region27: #{_seq2seq_forward.3} parent=11 // pred_region
        _
      $region28: #{_seq2seq_forward.3} parent=11 // pred_fallthru
        _
      // Predicated region
      $region29: #{_seq2seq_forward.3} parent=11 // pred_check
        %p242 = pneg %p126
      $region30: #{_seq2seq_forward.3} parent=11 // pred_check_branch
        %244 = sbr.rel (%p242) target = $region32
      $region31: #{_seq2seq_forward.3} parent=11 // pred_region
        _
      $region32: #{_seq2seq_forward.3} parent=11 // pred_fallthru
        _
      // Predicated region
      $region33: #{_seq2seq_forward.3} parent=11 // pred_check
        %p245 = pneg %p147
      $region34: #{_seq2seq_forward.3} parent=11 // pred_check_branch
        %247 = sbr.rel (%p245) target = $region36
      $region35: #{_seq2seq_forward.3} parent=11 // pred_region
        _
      $region36: #{_seq2seq_forward.3} parent=11 // pred_fallthru
        _
      // Predicated region
      $region37: #{_seq2seq_forward.3} parent=11 // pred_check
        %p248 = pneg %p168
      $region38: #{_seq2seq_forward.3} parent=11 // pred_check_branch
        %250 = sbr.rel (%p248) target = $region40
      $region39: #{_seq2seq_forward.3} parent=11 // pred_region
        _
      $region40: #{_seq2seq_forward.3} parent=11 // pred_fallthru
        _
      // Predicated region
      $region41: #{_seq2seq_forward.3} parent=11 // pred_check
        %p251 = pneg %p189
      $region42: #{_seq2seq_forward.3} parent=11 // pred_check_branch
        %253 = sbr.rel (%p251) target = $region44
      $region43: #{_seq2seq_forward.3} parent=11 // pred_region
        _
      $region44: #{_seq2seq_forward.3} parent=11 // pred_fallthru
        _
    $region12: #{_seq2seq_forward.3} parent=5 // pred_fallthru
      _
    %p254 = scmp.lt.s32.totalorder %s21, 7
    // Predicated region
    $region45: #{_seq2seq_forward.3} parent=5 // pred_check
      %p255 = pneg %p254
    $region46: #{_seq2seq_forward.3} parent=5 // pred_check_branch
      %257 = sbr.rel (%p255) target = $region48
    $region47: #{_seq2seq_forward.3} parent=5 // pred_region
      _
    $region48: #{_seq2seq_forward.3} parent=5 // pred_fallthru
      _
    %p258 = scmp.le.s32.totalorder 1, %s21
    %p259 = scmp.lt.s32.totalorder %s21, 8
    %p260 = pnand %p258, %p259
    %p261 = pneg %p260
    // Predicated region
    $region49: #{_seq2seq_forward.3} parent=5 // pred_check
      _
    $region50: #{_seq2seq_forward.3} parent=5 // pred_check_branch
      %263 = sbr.rel (%p260) target = $region52
    $region51: #{_seq2seq_forward.3} parent=5 // pred_region
      %s264 = ssub.s32 %s21, 1
      %p265 = pneg %p42
      %p266 = pneg %p39
      %p267 = pneg %p63
      %p268 = pneg %p60
      %p269 = pneg %p84
      %p270 = pneg %p81
      %p271 = pneg %p105
      %p272 = pneg %p102
      %p273 = pneg %p126
      %p274 = pneg %p123
      %p275 = pneg %p147
      %p276 = pneg %p144
      %p277 = pneg %p168
      %p278 = pneg %p165
      %p279 = pneg %p189
      %p280 = pneg %p186
      %p281 = pneg %p215
      %p282 = pneg %p212
      %p283 = scmp.lt.s32.totalorder %s26, 6
      %s284 = scalar_select %p283, %s26, 6
      %s285 = smul.addr %s284, 8
      %s286 = scalar_lea.vmem %s9, %s285
      %p287 = scmp.lt.s32.totalorder %s26, 6
      %s288 = scalar_select %p287, %s26, 6
      %s289 = smul.addr %s288, 8
      %s290 = scalar_lea.vmem %s9, %s289
      %p291 = scmp.eq.s32.totalorder %s26, 0
      // Predicated region
      $region53: #{_seq2seq_forward.3} parent=51 // pred_check
        %p292 = pneg %p291
      $region54: #{_seq2seq_forward.3} parent=51 // pred_check_branch
        %294 = sbr.rel (%p292) target = $region56
      $region55: #{_seq2seq_forward.3} parent=51 // pred_region
        %v295 = vld [vmem:[%s2] sm:$0xff]
        %296 = vst [vmem:[#allocation3] sm:$0xff] %v295
        %v297 = vld [vmem:[%s3] sm:$0xff]
        %298 = vst [vmem:[#allocation4] sm:$0xff] %v297
        %v299 = vld [vmem:[%s1] sm:$0xff]
        %300 = vst [vmem:[#allocation5] sm:$0xff] %v299
      $region56: #{_seq2seq_forward.3} parent=51 // pred_fallthru
        _
      %v301 = vld [vmem:[#allocation5] sm:$0xff]
      %v302 = vld [vmem:[%s4] sm:$0xff]
      %v303 = vld [vmem:[%s4 + $0x8] sm:$0xff]
      %v304 = vld [vmem:[%s4 + $0x10] sm:$0xff]
      %v305 = vld [vmem:[%s4 + $0x18] sm:$0xff]
      %v306 = vld [vmem:[%s4 + $0x20] sm:$0xff]
      %v307 = vld [vmem:[%s4 + $0x28] sm:$0xff]
      %v308 = vld [vmem:[%s4 + $0x30] sm:$0xff]
      %v309 = vld [vmem:[%s4 + $0x38] sm:$0xff]
      %v310 = vld [vmem:[%s4 + $0x40] sm:$0xff]
      %v311 = vld [vmem:[%s4 + $0x48] sm:$0xff]
      %v312 = vld [vmem:[%s4 + $0x50] sm:$0xff]
      %v313 = vld [vmem:[%s4 + $0x58] sm:$0xff]
      %v314 = vld [vmem:[%s4 + $0x60] sm:$0xff]
      %v315 = vld [vmem:[%s4 + $0x68] sm:$0xff]
      %v316 = vld [vmem:[%s4 + $0x70] sm:$0xff]
      %v317 = vld [vmem:[%s4 + $0x78] sm:$0xff]
      %318 = vmatprep.subr.mxu0 0.0
      %319 = vmatpush1.msra.mxu0 %v302
      %320 = vmatprep.subr.mxu0 0.0
      %321 = vmatpush1.msra.mxu0 %v303
      %322 = vmatprep.subr.mxu0 0.0
      %323 = vmatpush1.msra.mxu0 %v304
      %324 = vmatprep.subr.mxu0 0.0
      %325 = vmatpush1.msra.mxu0 %v305
      %326 = vmatprep.subr.mxu0 0.0
      %327 = vmatpush1.msra.mxu0 %v306
      %328 = vmatprep.subr.mxu0 0.0
      %329 = vmatpush1.msra.mxu0 %v307
      %330 = vmatprep.subr.mxu0 0.0
      %331 = vmatpush1.msra.mxu0 %v308
      %332 = vmatprep.subr.mxu0 0.0
      %333 = vmatpush1.msra.mxu0 %v309
      %334 = vmatprep.subr.mxu0 0.0
      %335 = vmatpush1.msra.mxu0 %v310
      %336 = vmatprep.subr.mxu0 0.0
      %337 = vmatpush1.msra.mxu0 %v311
      %338 = vmatprep.subr.mxu0 0.0
      %339 = vmatpush1.msra.mxu0 %v312
      %340 = vmatprep.subr.mxu0 0.0
      %341 = vmatpush1.msra.mxu0 %v313
      %342 = vmatprep.subr.mxu0 0.0
      %343 = vmatpush1.msra.mxu0 %v314
      %344 = vmatprep.subr.mxu0 0.0
      %345 = vmatpush1.msra.mxu0 %v315
      %346 = vmatprep.subr.mxu0 0.0
      %347 = vmatpush1.msra.mxu0 %v316
      %348 = vmatprep.subr.mxu0 0.0
      %349 = vmatpush1.msra.mxu0 %v317
      %350 = vmatprep.subr.mxu0 0.0
      %351 = vmatpush1.msra.mxu0 0.0
      %352 = vmatprep.subr.mxu0 0.0
      %353 = vmatpush1.msra.mxu0 0.0
      %354 = vmatprep.subr.mxu0 0.0
      %355 = vmatpush1.msra.mxu0 0.0
      %356 = vmatprep.subr.mxu0 0.0
      %357 = vmatpush1.msra.mxu0 0.0
      %358 = vmatprep.subr.mxu0 0.0
      %359 = vmatpush1.msra.mxu0 0.0
      %360 = vmatprep.subr.mxu0 0.0
      %361 = vmatpush1.msra.mxu0 0.0
      %362 = vmatprep.subr.mxu0 0.0
      %363 = vmatpush1.msra.mxu0 0.0
      %364 = vmatprep.subr.mxu0 0.0
      %365 = vmatpush1.msra.mxu0 0.0
      %366 = vmatprep.subr.mxu0 0.0
      %367 = vmatpush1.msra.mxu0 0.0
      %368 = vmatprep.subr.mxu0 0.0
      %369 = vmatpush1.msra.mxu0 0.0
      %370 = vmatprep.subr.mxu0 0.0
      %371 = vmatpush1.msra.mxu0 0.0
      %372 = vmatprep.subr.mxu0 0.0
      %373 = vmatpush1.msra.mxu0 0.0
      %374 = vmatprep.subr.mxu0 0.0
      %375 = vmatpush1.msra.mxu0 0.0
      %376 = vmatprep.subr.mxu0 0.0
      %377 = vmatpush1.msra.mxu0 0.0
      %378 = vmatprep.subr.mxu0 0.0
      %379 = vmatpush1.msra.mxu0 0.0
      %380 = vmatprep.subr.mxu0 0.0
      %381 = vmatpush1.msra.mxu0 0.0
      %382 = vmatprep.mubr.f32.mxu0 0.0
      %383 = vmatmul.mubr.f32.gmra.mrb[0].mxu0 %v301
      %v384 = vpop.f32.mrb[0].mxu0
      %v385 = vadd.f32 0.0, %v384
      %v386 = vpop.f32.mrb[0].mxu0
      %387 = vdwg.mxu0
      %388 = vst [vmem:[#allocation2] sm:$0xff] %v385
      %v389 = vld [vmem:[#allocation3] sm:$0xff]
      %390 = vst [vmem:[#allocation2 + $0x8] sm:$0xff] %v389
      %v391 = vld [vmem:[#allocation2] sm:$0xff]
      %v392 = vld [vmem:[#allocation2 + $0x8] sm:$0xff]
      %v393 = vld [vmem:[#allocation4] sm:$0xff]
      %v394 = vld [vmem:[%s5] sm:$0xff]
      %v395 = vld [vmem:[%s5 + $0x8] sm:$0xff]
      %v396 = vld [vmem:[%s5 + $0x10] sm:$0xff]
      %v397 = vld [vmem:[%s5 + $0x18] sm:$0xff]
      %v398 = vld [vmem:[%s5 + $0x20] sm:$0xff]
      %v399 = vld [vmem:[%s5 + $0x28] sm:$0xff]
      %v400 = vld [vmem:[%s5 + $0x30] sm:$0xff]
      %v401 = vld [vmem:[%s5 + $0x38] sm:$0xff]
      %v402 = vld [vmem:[%s5 + $0x40] sm:$0xff]
      %v403 = vld [vmem:[%s5 + $0x48] sm:$0xff]
      %v404 = vld [vmem:[%s5 + $0x50] sm:$0xff]
      %v405 = vld [vmem:[%s5 + $0x58] sm:$0xff]
      %v406 = vld [vmem:[%s5 + $0x60] sm:$0xff]
      %v407 = vld [vmem:[%s5 + $0x68] sm:$0xff]
      %v408 = vld [vmem:[%s5 + $0x70] sm:$0xff]
      %v409 = vld [vmem:[%s5 + $0x78] sm:$0xff]
      %v410 = vld [vmem:[%s5 + $0x80] sm:$0xff]
      %v411 = vld [vmem:[%s5 + $0x88] sm:$0xff]
      %v412 = vld [vmem:[%s5 + $0x90] sm:$0xff]
      %v413 = vld [vmem:[%s5 + $0x98] sm:$0xff]
      %v414 = vld [vmem:[%s5 + $0xa0] sm:$0xff]
      %v415 = vld [vmem:[%s5 + $0xa8] sm:$0xff]
      %v416 = vld [vmem:[%s5 + $0xb0] sm:$0xff]
      %v417 = vld [vmem:[%s5 + $0xb8] sm:$0xff]
      %v418 = vld [vmem:[%s5 + $0xc0] sm:$0xff]
      %v419 = vld [vmem:[%s5 + $0xc8] sm:$0xff]
      %v420 = vld [vmem:[%s5 + $0xd0] sm:$0xff]
      %v421 = vld [vmem:[%s5 + $0xd8] sm:$0xff]
      %v422 = vld [vmem:[%s5 + $0xe0] sm:$0xff]
      %v423 = vld [vmem:[%s5 + $0xe8] sm:$0xff]
      %v424 = vld [vmem:[%s5 + $0xf0] sm:$0xff]
      %v425 = vld [vmem:[%s5 + $0xf8] sm:$0xff]
      %v426 = vld [vmem:[%s5 + $0x100] sm:$0xff]
      %v427 = vld [vmem:[%s5 + $0x108] sm:$0xff]
      %v428 = vld [vmem:[%s5 + $0x110] sm:$0xff]
      %v429 = vld [vmem:[%s5 + $0x118] sm:$0xff]
      %v430 = vld [vmem:[%s5 + $0x120] sm:$0xff]
      %v431 = vld [vmem:[%s5 + $0x128] sm:$0xff]
      %v432 = vld [vmem:[%s5 + $0x130] sm:$0xff]
      %v433 = vld [vmem:[%s5 + $0x138] sm:$0xff]
      %v434 = vld [vmem:[%s5 + $0x140] sm:$0xff]
      %v435 = vld [vmem:[%s5 + $0x148] sm:$0xff]
      %v436 = vld [vmem:[%s5 + $0x150] sm:$0xff]
      %v437 = vld [vmem:[%s5 + $0x158] sm:$0xff]
      %v438 = vld [vmem:[%s5 + $0x160] sm:$0xff]
      %v439 = vld [vmem:[%s5 + $0x168] sm:$0xff]
      %v440 = vld [vmem:[%s5 + $0x170] sm:$0xff]
      %v441 = vld [vmem:[%s5 + $0x178] sm:$0xff]
      %v442 = vld [vmem:[%s5 + $0x180] sm:$0xff]
      %v443 = vld [vmem:[%s5 + $0x188] sm:$0xff]
      %v444 = vld [vmem:[%s5 + $0x190] sm:$0xff]
      %v445 = vld [vmem:[%s5 + $0x198] sm:$0xff]
      %v446 = vld [vmem:[%s5 + $0x1a0] sm:$0xff]
      %v447 = vld [vmem:[%s5 + $0x1a8] sm:$0xff]
      %v448 = vld [vmem:[%s5 + $0x1b0] sm:$0xff]
      %v449 = vld [vmem:[%s5 + $0x1b8] sm:$0xff]
      %v450 = vld [vmem:[%s5 + $0x1c0] sm:$0xff]
      %v451 = vld [vmem:[%s5 + $0x1c8] sm:$0xff]
      %v452 = vld [vmem:[%s5 + $0x1d0] sm:$0xff]
      %v453 = vld [vmem:[%s5 + $0x1d8] sm:$0xff]
      %v454 = vld [vmem:[%s5 + $0x1e0] sm:$0xff]
      %v455 = vld [vmem:[%s5 + $0x1e8] sm:$0xff]
      %v456 = vld [vmem:[%s5 + $0x1f0] sm:$0xff]
      %v457 = vld [vmem:[%s5 + $0x1f8] sm:$0xff]
      %v458 = vld [vmem:[%s5 + $0x200] sm:$0xff]
      %v459 = vld [vmem:[%s5 + $0x208] sm:$0xff]
      %v460 = vld [vmem:[%s5 + $0x210] sm:$0xff]
      %v461 = vld [vmem:[%s5 + $0x218] sm:$0xff]
      %v462 = vld [vmem:[%s5 + $0x220] sm:$0xff]
      %v463 = vld [vmem:[%s5 + $0x228] sm:$0xff]
      %v464 = vld [vmem:[%s5 + $0x230] sm:$0xff]
      %v465 = vld [vmem:[%s5 + $0x238] sm:$0xff]
      %v466 = vld [vmem:[%s5 + $0x240] sm:$0xff]
      %v467 = vld [vmem:[%s5 + $0x248] sm:$0xff]
      %v468 = vld [vmem:[%s5 + $0x250] sm:$0xff]
      %v469 = vld [vmem:[%s5 + $0x258] sm:$0xff]
      %v470 = vld [vmem:[%s5 + $0x260] sm:$0xff]
      %v471 = vld [vmem:[%s5 + $0x268] sm:$0xff]
      %v472 = vld [vmem:[%s5 + $0x270] sm:$0xff]
      %v473 = vld [vmem:[%s5 + $0x278] sm:$0xff]
      %v474 = vld [vmem:[%s5 + $0x280] sm:$0xff]
      %v475 = vld [vmem:[%s5 + $0x288] sm:$0xff]
      %v476 = vld [vmem:[%s5 + $0x290] sm:$0xff]
      %v477 = vld [vmem:[%s5 + $0x298] sm:$0xff]
      %v478 = vld [vmem:[%s5 + $0x2a0] sm:$0xff]
      %v479 = vld [vmem:[%s5 + $0x2a8] sm:$0xff]
      %v480 = vld [vmem:[%s5 + $0x2b0] sm:$0xff]
      %v481 = vld [vmem:[%s5 + $0x2b8] sm:$0xff]
      %v482 = vld [vmem:[%s5 + $0x2c0] sm:$0xff]
      %v483 = vld [vmem:[%s5 + $0x2c8] sm:$0xff]
      %v484 = vld [vmem:[%s5 + $0x2d0] sm:$0xff]
      %v485 = vld [vmem:[%s5 + $0x2d8] sm:$0xff]
      %v486 = vld [vmem:[%s5 + $0x2e0] sm:$0xff]
      %v487 = vld [vmem:[%s5 + $0x2e8] sm:$0xff]
      %v488 = vld [vmem:[%s5 + $0x2f0] sm:$0xff]
      %v489 = vld [vmem:[%s5 + $0x2f8] sm:$0xff]
      %v490 = vld [vmem:[%s5 + $0x300] sm:$0xff]
      %v491 = vld [vmem:[%s5 + $0x308] sm:$0xff]
      %v492 = vld [vmem:[%s5 + $0x310] sm:$0xff]
      %v493 = vld [vmem:[%s5 + $0x318] sm:$0xff]
      %v494 = vld [vmem:[%s5 + $0x320] sm:$0xff]
      %v495 = vld [vmem:[%s5 + $0x328] sm:$0xff]
      %v496 = vld [vmem:[%s5 + $0x330] sm:$0xff]
      %v497 = vld [vmem:[%s5 + $0x338] sm:$0xff]
      %v498 = vld [vmem:[%s5 + $0x340] sm:$0xff]
      %v499 = vld [vmem:[%s5 + $0x348] sm:$0xff]
      %v500 = vld [vmem:[%s5 + $0x350] sm:$0xff]
      %v501 = vld [vmem:[%s5 + $0x358] sm:$0xff]
      %v502 = vld [vmem:[%s5 + $0x360] sm:$0xff]
      %v503 = vld [vmem:[%s5 + $0x368] sm:$0xff]
      %v504 = vld [vmem:[%s5 + $0x370] sm:$0xff]
      %v505 = vld [vmem:[%s5 + $0x378] sm:$0xff]
      %v506 = vld [vmem:[%s5 + $0x380] sm:$0xff]
      %v507 = vld [vmem:[%s5 + $0x388] sm:$0xff]
      %v508 = vld [vmem:[%s5 + $0x390] sm:$0xff]
      %v509 = vld [vmem:[%s5 + $0x398] sm:$0xff]
      %v510 = vld [vmem:[%s5 + $0x3a0] sm:$0xff]
      %v511 = vld [vmem:[%s5 + $0x3a8] sm:$0xff]
      %v512 = vld [vmem:[%s5 + $0x3b0] sm:$0xff]
      %v513 = vld [vmem:[%s5 + $0x3b8] sm:$0xff]
      %v514 = vld [vmem:[%s5 + $0x3c0] sm:$0xff]
      %v515 = vld [vmem:[%s5 + $0x3c8] sm:$0xff]
      %v516 = vld [vmem:[%s5 + $0x3d0] sm:$0xff]
      %v517 = vld [vmem:[%s5 + $0x3d8] sm:$0xff]
      %v518 = vld [vmem:[%s5 + $0x3e0] sm:$0xff]
      %v519 = vld [vmem:[%s5 + $0x3e8] sm:$0xff]
      %v520 = vld [vmem:[%s5 + $0x3f0] sm:$0xff]
      %v521 = vld [vmem:[%s5 + $0x3f8] sm:$0xff]
      %v522 = vld [vmem:[%s6] sm:$0xf]
      %v524 = vlaneseq
      %v525 = vshrl.u32 %v524, 7
      %v526 = vsub.s32 0, %v525
      %v527 = vrot.slane %v522, %v526
      %v528 = vlaneseq
      %v529 = vshrl.u32 %v528, 7
      %v530 = vsub.s32 1, %v529
      %v531 = vrot.slane %v522, %v530
      %v532 = vlaneseq
      %v533 = vshrl.u32 %v532, 7
      %v534 = vsub.s32 2, %v533
      %v535 = vrot.slane %v522, %v534
      %v536 = vlaneseq
      %v537 = vshrl.u32 %v536, 7
      %v538 = vsub.s32 3, %v537
      %v539 = vrot.slane %v522, %v538
      %544 = vmatprep.subr.mxu0 %v395
      %545 = vmatpush1.msra.mxu0 %v394
      %546 = vmatprep.subr.mxu0 %v399
      %547 = vmatpush1.msra.mxu0 %v398
      %548 = vmatprep.subr.mxu0 %v403
      %549 = vmatpush1.msra.mxu0 %v402
      %550 = vmatprep.subr.mxu0 %v407
      %551 = vmatpush1.msra.mxu0 %v406
      %552 = vmatprep.subr.mxu0 %v411
      %553 = vmatpush1.msra.mxu0 %v410
      %554 = vmatprep.subr.mxu0 %v415
      %555 = vmatpush1.msra.mxu0 %v414
      %556 = vmatprep.subr.mxu0 %v419
      %557 = vmatpush1.msra.mxu0 %v418
      %558 = vmatprep.subr.mxu0 %v423
      %559 = vmatpush1.msra.mxu0 %v422
      %560 = vmatprep.subr.mxu0 %v427
      %561 = vmatpush1.msra.mxu0 %v426
      %562 = vmatprep.subr.mxu0 %v431
      %563 = vmatpush1.msra.mxu0 %v430
      %564 = vmatprep.subr.mxu0 %v435
      %565 = vmatpush1.msra.mxu0 %v434
      %566 = vmatprep.subr.mxu0 %v439
      %567 = vmatpush1.msra.mxu0 %v438
      %568 = vmatprep.subr.mxu0 %v443
      %569 = vmatpush1.msra.mxu0 %v442
      %570 = vmatprep.subr.mxu0 %v447
      %571 = vmatpush1.msra.mxu0 %v446
      %572 = vmatprep.subr.mxu0 %v451
      %573 = vmatpush1.msra.mxu0 %v450
      %574 = vmatprep.subr.mxu0 %v455
      %575 = vmatpush1.msra.mxu0 %v454
      %576 = vmatprep.subr.mxu0 %v459
      %577 = vmatpush1.msra.mxu0 %v458
      %578 = vmatprep.subr.mxu0 %v463
      %579 = vmatpush1.msra.mxu0 %v462
      %580 = vmatprep.subr.mxu0 %v467
      %581 = vmatpush1.msra.mxu0 %v466
      %582 = vmatprep.subr.mxu0 %v471
      %583 = vmatpush1.msra.mxu0 %v470
      %584 = vmatprep.subr.mxu0 %v475
      %585 = vmatpush1.msra.mxu0 %v474
      %586 = vmatprep.subr.mxu0 %v479
      %587 = vmatpush1.msra.mxu0 %v478
      %588 = vmatprep.subr.mxu0 %v483
      %589 = vmatpush1.msra.mxu0 %v482
      %590 = vmatprep.subr.mxu0 %v487
      %591 = vmatpush1.msra.mxu0 %v486
      %592 = vmatprep.subr.mxu0 %v491
      %593 = vmatpush1.msra.mxu0 %v490
      %594 = vmatprep.subr.mxu0 %v495
      %595 = vmatpush1.msra.mxu0 %v494
      %596 = vmatprep.subr.mxu0 %v499
      %597 = vmatpush1.msra.mxu0 %v498
      %598 = vmatprep.subr.mxu0 %v503
      %599 = vmatpush1.msra.mxu0 %v502
      %600 = vmatprep.subr.mxu0 %v507
      %601 = vmatpush1.msra.mxu0 %v506
      %602 = vmatprep.subr.mxu0 %v511
      %603 = vmatpush1.msra.mxu0 %v510
      %604 = vmatprep.subr.mxu0 %v515
      %605 = vmatpush1.msra.mxu0 %v514
      %606 = vmatprep.subr.mxu0 %v519
      %607 = vmatpush1.msra.mxu0 %v518
      %608 = vmatprep.mubr.f32.mxu0 %v392
      %609 = vmatmul.mubr.f32.gmra.mrb[0].mxu0 %v391
      %v610 = vpop.f32.mrb[0].mxu0
      %v611 = vadd.f32 %v527, %v610
      %v612 = vpop.f32.mrb[0].mxu0
      %v613 = vadd.f32 %v531, %v612
      %614 = vdwg.mxu0
      %615 = vmatprep.subr.mxu0 %v397
      %616 = vmatpush1.msra.mxu0 %v396
      %617 = vmatprep.subr.mxu0 %v401
      %618 = vmatpush1.msra.mxu0 %v400
      %619 = vmatprep.subr.mxu0 %v405
      %620 = vmatpush1.msra.mxu0 %v404
      %621 = vmatprep.subr.mxu0 %v409
      %622 = vmatpush1.msra.mxu0 %v408
      %623 = vmatprep.subr.mxu0 %v413
      %624 = vmatpush1.msra.mxu0 %v412
      %625 = vmatprep.subr.mxu0 %v417
      %626 = vmatpush1.msra.mxu0 %v416
      %627 = vmatprep.subr.mxu0 %v421
      %628 = vmatpush1.msra.mxu0 %v420
      %629 = vmatprep.subr.mxu0 %v425
      %630 = vmatpush1.msra.mxu0 %v424
      %631 = vmatprep.subr.mxu0 %v429
      %632 = vmatpush1.msra.mxu0 %v428
      %633 = vmatprep.subr.mxu0 %v433
      %634 = vmatpush1.msra.mxu0 %v432
      %635 = vmatprep.subr.mxu0 %v437
      %636 = vmatpush1.msra.mxu0 %v436
      %637 = vmatprep.subr.mxu0 %v441
      %638 = vmatpush1.msra.mxu0 %v440
      %639 = vmatprep.subr.mxu0 %v445
      %640 = vmatpush1.msra.mxu0 %v444
      %641 = vmatprep.subr.mxu0 %v449
      %642 = vmatpush1.msra.mxu0 %v448
      %643 = vmatprep.subr.mxu0 %v453
      %644 = vmatpush1.msra.mxu0 %v452
      %645 = vmatprep.subr.mxu0 %v457
      %646 = vmatpush1.msra.mxu0 %v456
      %647 = vmatprep.subr.mxu0 %v461
      %648 = vmatpush1.msra.mxu0 %v460
      %649 = vmatprep.subr.mxu0 %v465
      %650 = vmatpush1.msra.mxu0 %v464
      %651 = vmatprep.subr.mxu0 %v469
      %652 = vmatpush1.msra.mxu0 %v468
      %653 = vmatprep.subr.mxu0 %v473
      %654 = vmatpush1.msra.mxu0 %v472
      %655 = vmatprep.subr.mxu0 %v477
      %656 = vmatpush1.msra.mxu0 %v476
      %657 = vmatprep.subr.mxu0 %v481
      %658 = vmatpush1.msra.mxu0 %v480
      %659 = vmatprep.subr.mxu0 %v485
      %660 = vmatpush1.msra.mxu0 %v484
      %661 = vmatprep.subr.mxu0 %v489
      %662 = vmatpush1.msra.mxu0 %v488
      %663 = vmatprep.subr.mxu0 %v493
      %664 = vmatpush1.msra.mxu0 %v492
      %665 = vmatprep.subr.mxu0 %v497
      %666 = vmatpush1.msra.mxu0 %v496
      %667 = vmatprep.subr.mxu0 %v501
      %668 = vmatpush1.msra.mxu0 %v500
      %669 = vmatprep.subr.mxu0 %v505
      %670 = vmatpush1.msra.mxu0 %v504
      %671 = vmatprep.subr.mxu0 %v509
      %672 = vmatpush1.msra.mxu0 %v508
      %673 = vmatprep.subr.mxu0 %v513
      %674 = vmatpush1.msra.mxu0 %v512
      %675 = vmatprep.subr.mxu0 %v517
      %676 = vmatpush1.msra.mxu0 %v516
      %677 = vmatprep.subr.mxu0 %v521
      %678 = vmatpush1.msra.mxu0 %v520
      %679 = vmatprep.mubr.f32.mxu0 %v392
      %680 = vmatmul.mubr.f32.gmra.mrb[0].mxu0 %v391
      %v681 = vpop.f32.mrb[0].mxu0
      %v682 = vadd.f32 %v535, %v681
      %v683 = vpop.f32.mrb[0].mxu0
      %v684 = vadd.f32 %v539, %v683
      %685 = vdwg.mxu0
      %v686 = vxor.u32 %v611, 2147483648
      %v687 = vmul.f32 %v686, 1.442695
      %v688 = vpow.pop %v687
      %v689 = vadd.f32 %v688, 1.0
      %v690 = vrcp.pop %v689
      %v691 = vmul.f32 1.0, %v690
      %v692 = vxor.u32 %v613, 2147483648
      %v693 = vmul.f32 %v692, 1.442695
      %v694 = vpow.pop %v693
      %v695 = vadd.f32 %v694, 1.0
      %v696 = vrcp.pop %v695
      %v697 = vmul.f32 1.0, %v696
      %v698 = vtanh.pop %v682
      %v699 = vxor.u32 %v684, 2147483648
      %v700 = vmul.f32 %v699, 1.442695
      %v701 = vpow.pop %v700
      %v702 = vadd.f32 %v701, 1.0
      %v703 = vrcp.pop %v702
      %v704 = vmul.f32 1.0, %v703
      %v705 = vmul.f32 %v697, %v393
      %v706 = vmul.f32 %v691, %v698
      %v707 = vadd.f32 %v705, %v706
      %v708 = vtanh.pop %v707
      %v709 = vmul.f32 %v704, %v708
      %710 = vst [vmem:[#allocation3] sm:$0xff] %v709
      %711 = vst [vmem:[#allocation4] sm:$0xff] %v707
      %v712 = vld [vmem:[%s7] sm:$0xff]
      %v713 = vld [vmem:[%s7 + $0x8] sm:$0xff]
      %v714 = vld [vmem:[%s7 + $0x10] sm:$0xff]
      %v715 = vld [vmem:[%s7 + $0x18] sm:$0xff]
      %v716 = vld [vmem:[%s7 + $0x20] sm:$0xff]
      %v717 = vld [vmem:[%s7 + $0x28] sm:$0xff]
      %v718 = vld [vmem:[%s7 + $0x30] sm:$0xff]
      %v719 = vld [vmem:[%s7 + $0x38] sm:$0xff]
      %v720 = vld [vmem:[%s7 + $0x40] sm:$0xff]
      %v721 = vld [vmem:[%s7 + $0x48] sm:$0xff]
      %v722 = vld [vmem:[%s7 + $0x50] sm:$0xff]
      %v723 = vld [vmem:[%s7 + $0x58] sm:$0xff]
      %v724 = vld [vmem:[%s7 + $0x60] sm:$0xff]
      %v725 = vld [vmem:[%s7 + $0x68] sm:$0xff]
      %v726 = vld [vmem:[%s7 + $0x70] sm:$0xff]
      %v727 = vld [vmem:[%s7 + $0x78] sm:$0xff]
      %v728 = vld [vmem:[%s8] sm:$0x1]
      %v730 = vlaneseq
      %v731 = vshrl.u32 %v730, 7
      %v732 = vsub.s32 0, %v731
      %v733 = vrot.slane %v728, %v732
      %735 = vmatprep.subr.mxu0 0.0
      %736 = vmatpush1.msra.mxu0 %v712
      %737 = vmatprep.subr.mxu0 0.0
      %738 = vmatpush1.msra.mxu0 %v713
      %739 = vmatprep.subr.mxu0 0.0
      %740 = vmatpush1.msra.mxu0 %v714
      %741 = vmatprep.subr.mxu0 0.0
      %742 = vmatpush1.msra.mxu0 %v715
      %743 = vmatprep.subr.mxu0 0.0
      %744 = vmatpush1.msra.mxu0 %v716
      %745 = vmatprep.subr.mxu0 0.0
      %746 = vmatpush1.msra.mxu0 %v717
      %747 = vmatprep.subr.mxu0 0.0
      %748 = vmatpush1.msra.mxu0 %v718
      %749 = vmatprep.subr.mxu0 0.0
      %750 = vmatpush1.msra.mxu0 %v719
      %751 = vmatprep.subr.mxu0 0.0
      %752 = vmatpush1.msra.mxu0 %v720
      %753 = vmatprep.subr.mxu0 0.0
      %754 = vmatpush1.msra.mxu0 %v721
      %755 = vmatprep.subr.mxu0 0.0
      %756 = vmatpush1.msra.mxu0 %v722
      %757 = vmatprep.subr.mxu0 0.0
      %758 = vmatpush1.msra.mxu0 %v723
      %759 = vmatprep.subr.mxu0 0.0
      %760 = vmatpush1.msra.mxu0 %v724
      %761 = vmatprep.subr.mxu0 0.0
      %762 = vmatpush1.msra.mxu0 %v725
      %763 = vmatprep.subr.mxu0 0.0
      %764 = vmatpush1.msra.mxu0 %v726
      %765 = vmatprep.subr.mxu0 0.0
      %766 = vmatpush1.msra.mxu0 %v727
      %767 = vmatprep.subr.mxu0 0.0
      %768 = vmatpush1.msra.mxu0 0.0
      %769 = vmatprep.subr.mxu0 0.0
      %770 = vmatpush1.msra.mxu0 0.0
      %771 = vmatprep.subr.mxu0 0.0
      %772 = vmatpush1.msra.mxu0 0.0
      %773 = vmatprep.subr.mxu0 0.0
      %774 = vmatpush1.msra.mxu0 0.0
      %775 = vmatprep.subr.mxu0 0.0
      %776 = vmatpush1.msra.mxu0 0.0
      %777 = vmatprep.subr.mxu0 0.0
      %778 = vmatpush1.msra.mxu0 0.0
      %779 = vmatprep.subr.mxu0 0.0
      %780 = vmatpush1.msra.mxu0 0.0
      %781 = vmatprep.subr.mxu0 0.0
      %782 = vmatpush1.msra.mxu0 0.0
      %783 = vmatprep.subr.mxu0 0.0
      %784 = vmatpush1.msra.mxu0 0.0
      %785 = vmatprep.subr.mxu0 0.0
      %786 = vmatpush1.msra.mxu0 0.0
      %787 = vmatprep.subr.mxu0 0.0
      %788 = vmatpush1.msra.mxu0 0.0
      %789 = vmatprep.subr.mxu0 0.0
      %790 = vmatpush1.msra.mxu0 0.0
      %791 = vmatprep.subr.mxu0 0.0
      %792 = vmatpush1.msra.mxu0 0.0
      %793 = vmatprep.subr.mxu0 0.0
      %794 = vmatpush1.msra.mxu0 0.0
      %795 = vmatprep.subr.mxu0 0.0
      %796 = vmatpush1.msra.mxu0 0.0
      %797 = vmatprep.subr.mxu0 0.0
      %798 = vmatpush1.msra.mxu0 0.0
      %799 = vmatprep.mubr.f32.mxu0 0.0
      %800 = vmatmul.mubr.f32.gmra.mrb[0].mxu0 %v709
      %v801 = vpop.f32.mrb[0].mxu0
      %v802 = vadd.f32 %v733, %v801
      %v803 = vpop.f32.mrb[0].mxu0
      %804 = vdwg.mxu0
      %805 = vst [vmem:[%s290] sm:$0xff] %v802
      %v806 = vlaneseq
      %v807 = vand.u32 %v806, 127
      %v808 = vcvt.s32.f32 %v807
      %vm809 = vcmp.lt.s32.totalorder %v807, 32
      %v810 = vsel %vm809, %v802, -inf
      %811 = vmax.xlane.f32.xlu0 %v810
      %v812 = vpop.xlane.xlu0 %811
      %vm813 = vcmp.ge.f32.partialorder %v810, %v812
      %v814 = vsel %vm813, %v808, 128.0
      %815 = vmin.xlane.f32.xlu0 %v814
      %v816 = vpop.xlane.xlu0 %815
      %vm817 = vcmp.eq.f32.partialorder %v808, %v816
      %v818 = vsel %vm817, 1, 0
      %v819 = vcvt.s32.f32 %v818
      %s820 = sld [smem:[#allocation7 + %s26]]
      %p821 = scmp.gt.s32.totalorder %s820, 0
      %s822 = scalar_select %p821, 1, 0
      %s823 = scvt.s32.f32 %s822
      %s824 = sadd.s32 %s26, 1
      %s825 = smul.u32 %s824, 8
      %s826 = scalar_lea.vmem %s1, %s825
      %v827 = vld [vmem:[%s826] sm:$0xff]
      %v828 = vstv %s823
      %v829 = vmul.f32 %v828, %v827
      %s830 = ssub.f32 1.0, %s823
      %v831 = vstv %s830
      %v832 = vmul.f32 %v831, %v819
      %v833 = vadd.f32 %v829, %v832
      %834 = vst [vmem:[#allocation5] sm:$0xff] %v833
      %p835 = scmp.lt.s32.totalorder %s26, 6
      %s836 = scalar_select %p835, %s26, 6
      %s837 = smul.addr %s836, 8
      %s838 = scalar_lea.vmem %s9, %s837
      // Predicated region
      $region57: #{_seq2seq_forward.3} parent=51 // pred_check
        %p839 = pneg %p212
      $region58: #{_seq2seq_forward.3} parent=51 // pred_check_branch
        %841 = sbr.rel (%p839) target = $region60
      $region59: #{_seq2seq_forward.3} parent=51 // pred_region
        _
      $region60: #{_seq2seq_forward.3} parent=51 // pred_fallthru
        _
    $region52: #{_seq2seq_forward.3} parent=5 // pred_fallthru
      _
    %p842 = scmp.le.s32.totalorder 2, %s21
    // Predicated region
    $region61: #{_seq2seq_forward.3} parent=5 // pred_check
      %p843 = pneg %p842
    $region62: #{_seq2seq_forward.3} parent=5 // pred_check_branch
      %845 = sbr.rel (%p843) target = $region64
    $region63: #{_seq2seq_forward.3} parent=5 // pred_region
      %s846 = ssub.s32 %s21, 2
      // Predicated region
      $region65: #{_seq2seq_forward.3} parent=63 // pred_check
        %p847 = pneg %p218
      $region66: #{_seq2seq_forward.3} parent=63 // pred_check_branch
        %849 = sbr.rel (%p847) target = $region68
      $region67: #{_seq2seq_forward.3} parent=63 // pred_region
        %p850 = scmp.lt.s32.totalorder %s27, 6
        %s851 = scalar_select %p850, %s27, 6
        %s852 = smul.addr %s851, 8
        %s853 = scalar_lea.vmem %s9, %s852
      $region68: #{_seq2seq_forward.3} parent=63 // pred_fallthru
        _
    $region64: #{_seq2seq_forward.3} parent=5 // pred_fallthru
      _
  $region6: #{_seq2seq_forward.3} parent=0 // loop_footer
    %s25 = sadd.s32 1, %s21
  $region7: #{_seq2seq_forward.3} parent=0 // loop_footer_branch
    %20 = sbr.rel target = $region3
  $region8: #{_seq2seq_forward.3} parent=0 // loop_exit
    _

</llo_original>
